<compile_context>
chip_gen: v7x
topology: tpu7x:2x2x1
jax: 0.10.0
libtpu: 0.0.40
codegen_flags: <defaults>
</compile_context>

<pallas_src>
import jax
import jax.numpy as jnp
from jax.experimental import pallas as pl
from jax.experimental.pallas import tpu as pltpu


def potential_kernel(x_ref,
                     w1_ref, b1_ref,
                     w2_ref, b2_ref,
                     w3_ref, b3_ref,
                     w4_ref, b4_ref,
                     w5_ref, b5_ref,
                     out_ref):
    """One batch tile of the MLP in features-by-batch (F, tile_n) layout."""
    x = x_ref[...]                                  # (2, tile_n) f32
    w1 = w1_ref[...]                                # (32, 2)     f32

    # Layer 1 (K=2): two lane-dense broadcast multiply-adds on the VPU.
    h = w1[:, 0:1] * x[0:1, :] + w1[:, 1:2] * x[1:2, :] + b1_ref[...]  # (32, tile_n)
    h = jnp.maximum(h, 0.0).astype(jnp.bfloat16)

    def mxu_layer(h_bf16, w_ref, b_ref):
        # (F_out, F_in) @ (F_in, tile_n) -> (F_out, tile_n), f32 accumulation.
        acc = jnp.dot(w_ref[...], h_bf16, preferred_element_type=jnp.float32)
        # Epilogue (bias + ReLU) in the bias dtype: bf16 on v6e/v7x, f32 on v5e.
        act = jnp.maximum(acc.astype(b_ref.dtype) + b_ref[...], 0)
        return act.astype(jnp.bfloat16)

    h = mxu_layer(h, w2_ref, b2_ref)                # (64,  tile_n)
    h = mxu_layer(h, w3_ref, b3_ref)                # (128, tile_n)
    h = mxu_layer(h, w4_ref, b4_ref)                # (256, tile_n)

    # Last layer (256 -> 1): MXU matvec producing the lane-dense output row.
    y = jnp.dot(w5_ref[...], h, preferred_element_type=jnp.float32) + b5_ref[...]
    out_ref[...] = y.astype(out_ref.dtype)          # (1, tile_n)


def potential_forward(x, params, *, tile_n=2048, bf16_epilogue=True):
    """x: (N, 2) float32.  params: list of (W (out,in), b (out,)) f32.  Returns (N,)."""
    n = x.shape[0]
    x = x.astype(jnp.float32)

    # Tile selection: big tiles amortize the ~0.35us/step overhead, but cap so the
    # "parallel" grid axis has >= 2 steps whenever the batch allows (megacore on v7x).
    half = max(128, (((n + 1) // 2 + 127) // 128) * 128)
    tile_n = max(128, min(tile_n, half))
    n_pad = ((n + tile_n - 1) // tile_n) * tile_n
    grid_n = n_pad // tile_n

    # Features-on-sublanes, batch-on-lanes.
    x_t = x.T                                        # (2, N)
    if n_pad != n:
        x_t = jnp.pad(x_t, ((0, 0), (0, n_pad - n)))

    (w1, b1), (w2, b2), (w3, b3), (w4, b4), (w5, b5) = params
    ep_dtype = jnp.bfloat16 if bf16_epilogue else jnp.float32

    # Weights keep the PyTorch (out, in) layout; biases become (out, 1) columns.
    w1f = w1.astype(jnp.float32)                     # (32, 2)
    b1c = b1.reshape(-1, 1).astype(jnp.float32)      # (32, 1)
    w2b = w2.astype(jnp.bfloat16)                    # (64, 32)
    b2c = b2.reshape(-1, 1).astype(ep_dtype)
    w3b = w3.astype(jnp.bfloat16)                    # (128, 64)
    b3c = b3.reshape(-1, 1).astype(ep_dtype)
    w4b = w4.astype(jnp.bfloat16)                    # (256, 128)
    b4c = b4.reshape(-1, 1).astype(ep_dtype)
    w5b = w5.reshape(1, -1).astype(jnp.bfloat16)     # (1, 256)
    b5c = b5.reshape(1, 1).astype(jnp.float32)       # (1, 1)

    def const_spec(arr):
        # Full-extent block, same block every grid step -> DMA'd once, VMEM-resident.
        return pl.BlockSpec(arr.shape, lambda i: (0, 0))

    in_specs = [
        pl.BlockSpec((2, tile_n), lambda i: (0, i)),  # x tile, lane-dense
        const_spec(w1f), const_spec(b1c),
        const_spec(w2b), const_spec(b2c),
        const_spec(w3b), const_spec(b3c),
        const_spec(w4b), const_spec(b4c),
        const_spec(w5b), const_spec(b5c),
    ]
    out_spec = pl.BlockSpec((1, tile_n), lambda i: (0, i))  # lane-dense output row

    # Advisory cost estimate for XLA's scheduler.
    flops_per_row = 2 * (2 * 32 + 32 * 64 + 64 * 128 + 128 * 256 + 256)
    weight_bytes = sum(int(a.size) * a.dtype.itemsize
                       for a in (w1f, b1c, w2b, b2c, w3b, b3c, w4b, b4c, w5b, b5c))
    cost = pl.CostEstimate(flops=flops_per_row * n_pad,
                           transcendentals=0,
                           bytes_accessed=n_pad * (2 * 4 + 4) + weight_bytes)

    out_row = pl.pallas_call(
        potential_kernel,
        out_shape=jax.ShapeDtypeStruct((1, n_pad), jnp.float32),
        grid_spec=pltpu.PrefetchScalarGridSpec(
            num_scalar_prefetch=0,
            grid=(grid_n,),
            in_specs=in_specs,
            out_specs=out_spec,
        ),
        compiler_params=pltpu.CompilerParams(
            dimension_semantics=("parallel",),   # dual-TC sharding on v7x
        ),
        cost_estimate=cost,
    )(x_t, w1f, b1c, w2b, b2c, w3b, b3c, w4b, b4c, w5b, b5c)

    # x.ravel() in the PyTorch reference (drop padding columns).
    return out_row.reshape(-1)[:n]


def init_params(key, num_layers=5, hidden_size_0=32):
    """Deterministic init matching the PyTorch module's shapes.

    Layer dims: 2 -> 32 -> 64 -> 128 -> 256 -> 1.
    Weights stored PyTorch-style as (out, in); biases as (out,).
    """
    dims = [2]
    for i in range(num_layers - 1):
        dims.append(hidden_size_0 * (2 ** i))
    dims.append(1)  # last_linear output

    params = []
    for i in range(len(dims) - 1):
        fan_in, fan_out = dims[i], dims[i + 1]
        key, kw, kb = jax.random.split(key, 3)
        bound = 1.0 / jnp.sqrt(jnp.float32(fan_in))  # nn.Linear default init
        w = jax.random.uniform(kw, (fan_out, fan_in), jnp.float32, -bound, bound)
        b = jax.random.uniform(kb, (fan_out,), jnp.float32, -bound, bound)
        params.append((w, b))
    return params


def _reference(x, params):
    """Pure-JAX f32 reference of the same math (PyTorch semantics)."""
    h = x
    for i, (w, b) in enumerate(params):
        h = h @ w.T + b
        if i < len(params) - 1:
            h = jnp.maximum(h, 0.0)
    return h.reshape(-1)


if __name__ == "__main__":
    key = jax.random.PRNGKey(0)
    key, kx = jax.random.split(key)

    # small example input consistent with the module: (batch, 2)
    batch = 200
    x = jax.random.normal(kx, (batch, 2), dtype=jnp.float32)
    params = init_params(key)

    # default config (tile capped to 128 here -> 2 grid steps, exercises tiling + padding)
    out = jax.block_until_ready(potential_forward(x, params))
    # f32 epilogue path (what you'd pick on v5e)
    out_f32ep = jax.block_until_ready(
        potential_forward(x, params, bf16_epilogue=False))

    ref = _reference(x, params)

    assert out.shape == (batch,), out.shape
    assert out_f32ep.shape == (batch,), out_f32ep.shape
    # bf16 matmuls with f32 accumulation: loose tolerance vs the f32 reference
    assert jnp.allclose(out, ref, atol=5e-2, rtol=5e-2), (
        float(jnp.max(jnp.abs(out - ref))))
    assert jnp.allclose(out_f32ep, ref, atol=5e-2, rtol=5e-2), (
        float(jnp.max(jnp.abs(out_f32ep - ref))))
    # the two epilogue variants must agree closely (same bf16 matmul inputs)
    assert jnp.allclose(out, out_f32ep, atol=2e-2, rtol=2e-2)

    print("KERNEL_OK")
</pallas_src>

<mosaic_0001>
module attributes {stable_mosaic.version = 11 : i64} {
  func.func @potential_kernel(%arg0: i32, %arg1: memref<2x128xf32, #tpu.memory_space<vmem>>, %arg2: memref<32x2xf32, #tpu.memory_space<vmem>>, %arg3: memref<32x1xf32, #tpu.memory_space<vmem>>, %arg4: memref<64x32xbf16, #tpu.memory_space<vmem>>, %arg5: memref<64x1xbf16, #tpu.memory_space<vmem>>, %arg6: memref<128x64xbf16, #tpu.memory_space<vmem>>, %arg7: memref<128x1xbf16, #tpu.memory_space<vmem>>, %arg8: memref<256x128xbf16, #tpu.memory_space<vmem>>, %arg9: memref<256x1xbf16, #tpu.memory_space<vmem>>, %arg10: memref<1x256xbf16, #tpu.memory_space<vmem>>, %arg11: memref<1x1xf32, #tpu.memory_space<vmem>>, %arg12: memref<1x128xf32, #tpu.memory_space<vmem>>) attributes {dimension_semantics = [#tpu.dimension_semantics<parallel>], iteration_bounds = array<i64: 2>, scalar_prefetch = 0 : i64, scratch_operands = 0 : i64, tpu.core_type = #tpu.core_type<tc>, window_params = [{transform_indices = @transform_0, window_bounds = array<i64: 2, 128>}, {pipeline_mode = #tpu.pipeline_mode<synchronous>, transform_indices = @transform_1, window_bounds = array<i64: 32, 2>}, {pipeline_mode = #tpu.pipeline_mode<synchronous>, transform_indices = @transform_2, window_bounds = array<i64: 32, 1>}, {pipeline_mode = #tpu.pipeline_mode<synchronous>, transform_indices = @transform_3, window_bounds = array<i64: 64, 32>}, {pipeline_mode = #tpu.pipeline_mode<synchronous>, transform_indices = @transform_4, window_bounds = array<i64: 64, 1>}, {pipeline_mode = #tpu.pipeline_mode<synchronous>, transform_indices = @transform_5, window_bounds = array<i64: 128, 64>}, {pipeline_mode = #tpu.pipeline_mode<synchronous>, transform_indices = @transform_6, window_bounds = array<i64: 128, 1>}, {pipeline_mode = #tpu.pipeline_mode<synchronous>, transform_indices = @transform_7, window_bounds = array<i64: 256, 128>}, {pipeline_mode = #tpu.pipeline_mode<synchronous>, transform_indices = @transform_8, window_bounds = array<i64: 256, 1>}, {pipeline_mode = #tpu.pipeline_mode<synchronous>, transform_indices = @transform_9, window_bounds = array<i64: 1, 256>}, {pipeline_mode = #tpu.pipeline_mode<synchronous>, transform_indices = @transform_10, window_bounds = array<i64: 1, 1>}, {transform_indices = @transform_11, window_bounds = array<i64: 1, 128>}]} {
    %c0 = arith.constant 0 : index
    %c0_0 = arith.constant 0 : index
    %0 = vector.load %arg1[%c0, %c0_0] : memref<2x128xf32, #tpu.memory_space<vmem>>, vector<2x128xf32>
    %c0_1 = arith.constant 0 : index
    %c0_2 = arith.constant 0 : index
    %1 = vector.load %arg2[%c0_1, %c0_2] : memref<32x2xf32, #tpu.memory_space<vmem>>, vector<32x2xf32>
    %2 = vector.extract_strided_slice %1 {offsets = [0, 0], sizes = [32, 1], strides = [1, 1]} : vector<32x2xf32> to vector<32x1xf32>
    %3 = vector.extract_strided_slice %0 {offsets = [0, 0], sizes = [1, 128], strides = [1, 1]} : vector<2x128xf32> to vector<1x128xf32>
    %4 = vector.broadcast %2 : vector<32x1xf32> to vector<32x128xf32>
    %5 = vector.broadcast %3 : vector<1x128xf32> to vector<32x128xf32>
    %6 = arith.mulf %4, %5 : vector<32x128xf32>
    %7 = vector.extract_strided_slice %1 {offsets = [0, 1], sizes = [32, 1], strides = [1, 1]} : vector<32x2xf32> to vector<32x1xf32>
    %8 = vector.extract_strided_slice %0 {offsets = [1, 0], sizes = [1, 128], strides = [1, 1]} : vector<2x128xf32> to vector<1x128xf32>
    %9 = vector.broadcast %7 : vector<32x1xf32> to vector<32x128xf32>
    %10 = vector.broadcast %8 : vector<1x128xf32> to vector<32x128xf32>
    %11 = arith.mulf %9, %10 : vector<32x128xf32>
    %12 = arith.addf %6, %11 : vector<32x128xf32>
    %c0_3 = arith.constant 0 : index
    %c0_4 = arith.constant 0 : index
    %13 = vector.load %arg3[%c0_3, %c0_4] : memref<32x1xf32, #tpu.memory_space<vmem>>, vector<32x1xf32>
    %14 = vector.broadcast %13 : vector<32x1xf32> to vector<32x128xf32>
    %15 = arith.addf %12, %14 : vector<32x128xf32>
    %cst = arith.constant 0.000000e+00 : f32
    %16 = vector.broadcast %cst : f32 to vector<32x128xf32>
    %17 = arith.maximumf %15, %16 : vector<32x128xf32>
    %18 = arith.truncf %17 : vector<32x128xf32> to vector<32x128xbf16>
    %c0_5 = arith.constant 0 : index
    %c0_6 = arith.constant 0 : index
    %19 = vector.load %arg4[%c0_5, %c0_6] : memref<64x32xbf16, #tpu.memory_space<vmem>>, vector<64x32xbf16>
    %cst_7 = arith.constant dense<0.000000e+00> : vector<64x128xf32>
    %20 = tpu.matmul %19, %18, %cst_7 {dimension_numbers = #tpu.dot_dimension_numbers<[1], [0], [0], [1], [0, 0, 1, 1], [], []>} : vector<64x32xbf16>, vector<32x128xbf16>, vector<64x128xf32> -> vector<64x128xf32>
    %21 = arith.truncf %20 : vector<64x128xf32> to vector<64x128xbf16>
    %c0_8 = arith.constant 0 : index
    %c0_9 = arith.constant 0 : index
    %22 = vector.load %arg5[%c0_8, %c0_9] : memref<64x1xbf16, #tpu.memory_space<vmem>>, vector<64x1xbf16>
    %23 = vector.broadcast %22 : vector<64x1xbf16> to vector<64x128xbf16>
    %24 = arith.addf %21, %23 : vector<64x128xbf16>
    %cst_10 = arith.constant 0.000000e+00 : bf16
    %25 = vector.broadcast %cst_10 : bf16 to vector<64x128xbf16>
    %26 = arith.maximumf %24, %25 : vector<64x128xbf16>
    %c0_11 = arith.constant 0 : index
    %c0_12 = arith.constant 0 : index
    %27 = vector.load %arg6[%c0_11, %c0_12] : memref<128x64xbf16, #tpu.memory_space<vmem>>, vector<128x64xbf16>
    %cst_13 = arith.constant dense<0.000000e+00> : vector<128x128xf32>
    %28 = tpu.matmul %27, %26, %cst_13 {dimension_numbers = #tpu.dot_dimension_numbers<[1], [0], [0], [1], [0, 0, 1, 1], [], []>} : vector<128x64xbf16>, vector<64x128xbf16>, vector<128x128xf32> -> vector<128x128xf32>
    %29 = arith.truncf %28 : vector<128x128xf32> to vector<128x128xbf16>
    %c0_14 = arith.constant 0 : index
    %c0_15 = arith.constant 0 : index
    %30 = vector.load %arg7[%c0_14, %c0_15] : memref<128x1xbf16, #tpu.memory_space<vmem>>, vector<128x1xbf16>
    %31 = vector.broadcast %30 : vector<128x1xbf16> to vector<128x128xbf16>
    %32 = arith.addf %29, %31 : vector<128x128xbf16>
    %cst_16 = arith.constant 0.000000e+00 : bf16
    %33 = vector.broadcast %cst_16 : bf16 to vector<128x128xbf16>
    %34 = arith.maximumf %32, %33 : vector<128x128xbf16>
    %c0_17 = arith.constant 0 : index
    %c0_18 = arith.constant 0 : index
    %35 = vector.load %arg8[%c0_17, %c0_18] : memref<256x128xbf16, #tpu.memory_space<vmem>>, vector<256x128xbf16>
    %cst_19 = arith.constant dense<0.000000e+00> : vector<256x128xf32>
    %36 = tpu.matmul %35, %34, %cst_19 {dimension_numbers = #tpu.dot_dimension_numbers<[1], [0], [0], [1], [0, 0, 1, 1], [], []>} : vector<256x128xbf16>, vector<128x128xbf16>, vector<256x128xf32> -> vector<256x128xf32>
    %37 = arith.truncf %36 : vector<256x128xf32> to vector<256x128xbf16>
    %c0_20 = arith.constant 0 : index
    %c0_21 = arith.constant 0 : index
    %38 = vector.load %arg9[%c0_20, %c0_21] : memref<256x1xbf16, #tpu.memory_space<vmem>>, vector<256x1xbf16>
    %39 = vector.broadcast %38 : vector<256x1xbf16> to vector<256x128xbf16>
    %40 = arith.addf %37, %39 : vector<256x128xbf16>
    %cst_22 = arith.constant 0.000000e+00 : bf16
    %41 = vector.broadcast %cst_22 : bf16 to vector<256x128xbf16>
    %42 = arith.maximumf %40, %41 : vector<256x128xbf16>
    %c0_23 = arith.constant 0 : index
    %c0_24 = arith.constant 0 : index
    %43 = vector.load %arg10[%c0_23, %c0_24] : memref<1x256xbf16, #tpu.memory_space<vmem>>, vector<1x256xbf16>
    %cst_25 = arith.constant dense<0.000000e+00> : vector<1x128xf32>
    %44 = tpu.matmul %43, %42, %cst_25 {dimension_numbers = #tpu.dot_dimension_numbers<[1], [0], [0], [1], [0, 0, 1, 1], [], []>} : vector<1x256xbf16>, vector<256x128xbf16>, vector<1x128xf32> -> vector<1x128xf32>
    %c0_26 = arith.constant 0 : index
    %c0_27 = arith.constant 0 : index
    %45 = vector.load %arg11[%c0_26, %c0_27] : memref<1x1xf32, #tpu.memory_space<vmem>>, vector<1x1xf32>
    %46 = vector.broadcast %45 : vector<1x1xf32> to vector<1x128xf32>
    %47 = arith.addf %44, %46 : vector<1x128xf32>
    %c0_28 = arith.constant 0 : index
    %c0_29 = arith.constant 0 : index
    %48 = vector.load %arg12[%c0_28, %c0_29] : memref<1x128xf32, #tpu.memory_space<vmem>>, vector<1x128xf32>
    tpu.vector_store %arg12[%c0_28, %c0_29], %47 {strides = array<i32>} : memref<1x128xf32, #tpu.memory_space<vmem>>, vector<1x128xf32>,
    return
  }
  func.func @transform_0(%arg0: i32) -> (i32, i32) {
    %c0_i32 = arith.constant 0 : i32
    %c0_i32_0 = arith.constant 0 : i32
    return %c0_i32, %arg0 : i32, i32
  }
  func.func @transform_1(%arg0: i32) -> (i32, i32) {
    %c0_i32 = arith.constant 0 : i32
    %c0_i32_0 = arith.constant 0 : i32
    %c0_i32_1 = arith.constant 0 : i32
    return %c0_i32, %c0_i32_0 : i32, i32
  }
  func.func @transform_2(%arg0: i32) -> (i32, i32) {
    %c0_i32 = arith.constant 0 : i32
    %c0_i32_0 = arith.constant 0 : i32
    %c0_i32_1 = arith.constant 0 : i32
    return %c0_i32, %c0_i32_0 : i32, i32
  }
  func.func @transform_3(%arg0: i32) -> (i32, i32) {
    %c0_i32 = arith.constant 0 : i32
    %c0_i32_0 = arith.constant 0 : i32
    %c0_i32_1 = arith.constant 0 : i32
    return %c0_i32, %c0_i32_0 : i32, i32
  }
  func.func @transform_4(%arg0: i32) -> (i32, i32) {
    %c0_i32 = arith.constant 0 : i32
    %c0_i32_0 = arith.constant 0 : i32
    %c0_i32_1 = arith.constant 0 : i32
    return %c0_i32, %c0_i32_0 : i32, i32
  }
  func.func @transform_5(%arg0: i32) -> (i32, i32) {
    %c0_i32 = arith.constant 0 : i32
    %c0_i32_0 = arith.constant 0 : i32
    %c0_i32_1 = arith.constant 0 : i32
    return %c0_i32, %c0_i32_0 : i32, i32
  }
  func.func @transform_6(%arg0: i32) -> (i32, i32) {
    %c0_i32 = arith.constant 0 : i32
    %c0_i32_0 = arith.constant 0 : i32
    %c0_i32_1 = arith.constant 0 : i32
    return %c0_i32, %c0_i32_0 : i32, i32
  }
  func.func @transform_7(%arg0: i32) -> (i32, i32) {
    %c0_i32 = arith.constant 0 : i32
    %c0_i32_0 = arith.constant 0 : i32
    %c0_i32_1 = arith.constant 0 : i32
    return %c0_i32, %c0_i32_0 : i32, i32
  }
  func.func @transform_8(%arg0: i32) -> (i32, i32) {
    %c0_i32 = arith.constant 0 : i32
    %c0_i32_0 = arith.constant 0 : i32
    %c0_i32_1 = arith.constant 0 : i32
    return %c0_i32, %c0_i32_0 : i32, i32
  }
  func.func @transform_9(%arg0: i32) -> (i32, i32) {
    %c0_i32 = arith.constant 0 : i32
    %c0_i32_0 = arith.constant 0 : i32
    %c0_i32_1 = arith.constant 0 : i32
    return %c0_i32, %c0_i32_0 : i32, i32
  }
  func.func @transform_10(%arg0: i32) -> (i32, i32) {
    %c0_i32 = arith.constant 0 : i32
    %c0_i32_0 = arith.constant 0 : i32
    %c0_i32_1 = arith.constant 0 : i32
    return %c0_i32, %c0_i32_0 : i32, i32
  }
  func.func @transform_11(%arg0: i32) -> (i32, i32) {
    %c0_i32 = arith.constant 0 : i32
    %c0_i32_0 = arith.constant 0 : i32
    return %c0_i32, %arg0 : i32, i32
  }
}

</mosaic_0001>

<llo_original>
// kernel: tpu_custom_call.1
$region0: #{tpu_custom_call.1}
  #allocation0 [shape = 'u32[]', space=smem, size = 0x4, offset = 0x4, fixed_abs, tag = 'smem constant byte address 0x4 - core index']
  #allocation1 [shape = 'u32[144,128]{1,0:T(1,128)}', space=vmem, size = 0x12000, scoped, tag = 'internal scratch']
  #allocation2 [shape = 'f32[1,1]{1,0:T(1,128)S(1)}', space=vmem, size = 0x200, scoped, tag = 'scoped memory for tpu_custom_call.1']
  %s0 = inlined_call_operand.vmem [shape: f32[2,256], index: 0, kind: input, shape index: {}]
  %s1 = inlined_call_operand.vmem [shape: f32[32,2], index: 1, kind: input, shape index: {}]
  %s2 = inlined_call_operand.vmem [shape: f32[32,1], index: 2, kind: input, shape index: {}]
  %s3 = inlined_call_operand.vmem [shape: bf16[64,32], index: 3, kind: input, shape index: {}]
  %s4 = inlined_call_operand.vmem [shape: bf16[64,1], index: 4, kind: input, shape index: {}]
  %s5 = inlined_call_operand.vmem [shape: bf16[128,64], index: 5, kind: input, shape index: {}]
  %s6 = inlined_call_operand.vmem [shape: bf16[128,1], index: 6, kind: input, shape index: {}]
  %s7 = inlined_call_operand.vmem [shape: bf16[256,128], index: 7, kind: input, shape index: {}]
  %s8 = inlined_call_operand.vmem [shape: bf16[256,1], index: 8, kind: input, shape index: {}]
  %s9 = inlined_call_operand.vmem [shape: bf16[1,256], index: 9, kind: input, shape index: {}]
  %s10 = inlined_call_operand.<no memory space> [shape: f32[1,1], index: 10, kind: input, shape index: {}]
  %s11 = inlined_call_operand.hbm [shape: f32[1,256], index: 11, kind: output, shape index: {}]
  %s12 = sld [smem:[#allocation0]]
  $region77: #{tpu_custom_call.1} parent=0
    _
  %s14 = ssub.s32 1, %s12
  %s15 = scalar_select 0, %s14, %s12
  %v16 = vstv %s10
  %17 = vst [vmem:[#allocation2] sm:$0x1] %v16
  $region1: #{tpu_custom_call.1} parent=0
    #allocation3 [shape = 'u8[1024]{0}', space=vmem, size = 0x400, scoped, tag = 'output window, operand 0']
    #allocation4 [shape = 's32[2]{0}', space=sflag, size = 0x8, scoped, tag = 'scoped memory for tpu_custom_call.1']
    %18 = vsyncpa [#allocation4], 0
    %s19 = scalar_lea.sflag [#allocation4], 1
    %20 = vsyncpa %s19, 0
    loop: start=0, step=1, limit=4
    $region2: #{tpu_custom_call.1} parent=1 // loop_pre_header
      _
    $region3: #{tpu_custom_call.1} parent=1 // loop_header
      %s22 = sphi 0, %s26
      %p23 = scmp.ge.s32.totalorder %s22, 4
      %s32 = sphi 0, %s34
      %s35 = sphi 0, %s32
      %s36 = sphi 0, %s35
      %s52 = sphi 0, %s36
      %s56 = sphi 0, %s56
      %s58 = sphi 0, %s56
      %s59 = sphi 0, %s58
      %s73 = sphi 0, %s59
      %s77 = sphi 0, %s77
      %s79 = sphi 0, %s77
      %s80 = sphi 0, %s79
      %s94 = sphi 0, %s80
      %s98 = sphi 0, %s98
      %s100 = sphi 0, %s98
      %s101 = sphi 0, %s100
      %s115 = sphi 0, %s101
      %s119 = sphi 0, %s119
      %s121 = sphi 0, %s119
      %s122 = sphi 0, %s121
      %s136 = sphi 0, %s122
      %s140 = sphi 0, %s140
      %s142 = sphi 0, %s140
      %s143 = sphi 0, %s142
      %s157 = sphi 0, %s143
      %s161 = sphi 0, %s161
      %s163 = sphi 0, %s161
      %s164 = sphi 0, %s163
      %s178 = sphi 0, %s164
      %s182 = sphi 0, %s182
      %s184 = sphi 0, %s182
      %s185 = sphi 0, %s184
      %s199 = sphi 0, %s185
      %s203 = sphi 0, %s203
      %s205 = sphi 0, %s203
      %s206 = sphi 0, %s205
      %s220 = sphi 0, %s206
      %s224 = sphi 0, %s224
      %s226 = sphi 0, %s224
      %s227 = sphi 0, %s226
      %s241 = sphi 0, %s227
      %s245 = sphi 0, %s245
      %s247 = sphi 0, %s245
      %s248 = sphi 0, %s247
      %s262 = sphi 0, %s248
      %s268 = sphi 0, %s270
      %s271 = sphi 0, %s268
      %s272 = sphi 0, %s271
      %s288 = sphi 0, %s272
    $region4: #{tpu_custom_call.1} parent=1 // loop_header_branch
      %25 = sbr.rel (%p23) target = $region8
    $region5: #{tpu_custom_call.1} parent=1 // loop_body
      %s27 = ssub.s32 %s22, 1
      %s28 = ssub.s32 %s22, 2
      %s29 = sadd.s32 %s22, 1
      %s30 = ssub.s32 %s22, %s29
      %p31 = scmp.eq.s32.totalorder %s30, 0
      %s33 = sadd.s32 %s32, 1
      %s34 = scalar_select %p31, %s32, %s33
      %p37 = pneg %p31
      %p38 = scmp.eq.s32.totalorder %s22, 1
      %p39 = por %p37, %p38
      %p40 = scmp.ne.s32.totalorder %s32, %s35
      %p41 = scmp.eq.s32.totalorder %s22, 0
      %p42 = por %p40, %p41
      %p43 = scmp.ne.s32.totalorder %s32, %s35
      %p44 = scmp.eq.s32.totalorder %s27, 1
      %p45 = por %p43, %p44
      %p46 = scmp.ne.s32.totalorder %s35, %s36
      %p47 = scmp.eq.s32.totalorder %s27, 0
      %p48 = por %p46, %p47
      %p49 = scmp.ne.s32.totalorder %s35, %s36
      %p50 = scmp.eq.s32.totalorder %s28, 1
      %p51 = por %p49, %p50
      %p53 = scmp.ne.s32.totalorder %s36, %s52
      %p54 = scmp.eq.s32.totalorder %s28, 0
      %p55 = por %p53, %p54
      %s57 = sadd.s32 %s56, 1
      %p60 = scmp.eq.s32.totalorder %s22, 1
      %p61 = scmp.ne.s32.totalorder %s56, %s58
      %p62 = scmp.eq.s32.totalorder %s22, 0
      %p63 = por %p61, %p62
      %p64 = scmp.ne.s32.totalorder %s56, %s58
      %p65 = scmp.eq.s32.totalorder %s27, 1
      %p66 = por %p64, %p65
      %p67 = scmp.ne.s32.totalorder %s58, %s59
      %p68 = scmp.eq.s32.totalorder %s27, 0
      %p69 = por %p67, %p68
      %p70 = scmp.ne.s32.totalorder %s58, %s59
      %p71 = scmp.eq.s32.totalorder %s28, 1
      %p72 = por %p70, %p71
      %p74 = scmp.ne.s32.totalorder %s59, %s73
      %p75 = scmp.eq.s32.totalorder %s28, 0
      %p76 = por %p74, %p75
      %s78 = sadd.s32 %s77, 1
      %p81 = scmp.eq.s32.totalorder %s22, 1
      %p82 = scmp.ne.s32.totalorder %s77, %s79
      %p83 = scmp.eq.s32.totalorder %s22, 0
      %p84 = por %p82, %p83
      %p85 = scmp.ne.s32.totalorder %s77, %s79
      %p86 = scmp.eq.s32.totalorder %s27, 1
      %p87 = por %p85, %p86
      %p88 = scmp.ne.s32.totalorder %s79, %s80
      %p89 = scmp.eq.s32.totalorder %s27, 0
      %p90 = por %p88, %p89
      %p91 = scmp.ne.s32.totalorder %s79, %s80
      %p92 = scmp.eq.s32.totalorder %s28, 1
      %p93 = por %p91, %p92
      %p95 = scmp.ne.s32.totalorder %s80, %s94
      %p96 = scmp.eq.s32.totalorder %s28, 0
      %p97 = por %p95, %p96
      %s99 = sadd.s32 %s98, 1
      %p102 = scmp.eq.s32.totalorder %s22, 1
      %p103 = scmp.ne.s32.totalorder %s98, %s100
      %p104 = scmp.eq.s32.totalorder %s22, 0
      %p105 = por %p103, %p104
      %p106 = scmp.ne.s32.totalorder %s98, %s100
      %p107 = scmp.eq.s32.totalorder %s27, 1
      %p108 = por %p106, %p107
      %p109 = scmp.ne.s32.totalorder %s100, %s101
      %p110 = scmp.eq.s32.totalorder %s27, 0
      %p111 = por %p109, %p110
      %p112 = scmp.ne.s32.totalorder %s100, %s101
      %p113 = scmp.eq.s32.totalorder %s28, 1
      %p114 = por %p112, %p113
      %p116 = scmp.ne.s32.totalorder %s101, %s115
      %p117 = scmp.eq.s32.totalorder %s28, 0
      %p118 = por %p116, %p117
      %s120 = sadd.s32 %s119, 1
      %p123 = scmp.eq.s32.totalorder %s22, 1
      %p124 = scmp.ne.s32.totalorder %s119, %s121
      %p125 = scmp.eq.s32.totalorder %s22, 0
      %p126 = por %p124, %p125
      %p127 = scmp.ne.s32.totalorder %s119, %s121
      %p128 = scmp.eq.s32.totalorder %s27, 1
      %p129 = por %p127, %p128
      %p130 = scmp.ne.s32.totalorder %s121, %s122
      %p131 = scmp.eq.s32.totalorder %s27, 0
      %p132 = por %p130, %p131
      %p133 = scmp.ne.s32.totalorder %s121, %s122
      %p134 = scmp.eq.s32.totalorder %s28, 1
      %p135 = por %p133, %p134
      %p137 = scmp.ne.s32.totalorder %s122, %s136
      %p138 = scmp.eq.s32.totalorder %s28, 0
      %p139 = por %p137, %p138
      %s141 = sadd.s32 %s140, 1
      %p144 = scmp.eq.s32.totalorder %s22, 1
      %p145 = scmp.ne.s32.totalorder %s140, %s142
      %p146 = scmp.eq.s32.totalorder %s22, 0
      %p147 = por %p145, %p146
      %p148 = scmp.ne.s32.totalorder %s140, %s142
      %p149 = scmp.eq.s32.totalorder %s27, 1
      %p150 = por %p148, %p149
      %p151 = scmp.ne.s32.totalorder %s142, %s143
      %p152 = scmp.eq.s32.totalorder %s27, 0
      %p153 = por %p151, %p152
      %p154 = scmp.ne.s32.totalorder %s142, %s143
      %p155 = scmp.eq.s32.totalorder %s28, 1
      %p156 = por %p154, %p155
      %p158 = scmp.ne.s32.totalorder %s143, %s157
      %p159 = scmp.eq.s32.totalorder %s28, 0
      %p160 = por %p158, %p159
      %s162 = sadd.s32 %s161, 1
      %p165 = scmp.eq.s32.totalorder %s22, 1
      %p166 = scmp.ne.s32.totalorder %s161, %s163
      %p167 = scmp.eq.s32.totalorder %s22, 0
      %p168 = por %p166, %p167
      %p169 = scmp.ne.s32.totalorder %s161, %s163
      %p170 = scmp.eq.s32.totalorder %s27, 1
      %p171 = por %p169, %p170
      %p172 = scmp.ne.s32.totalorder %s163, %s164
      %p173 = scmp.eq.s32.totalorder %s27, 0
      %p174 = por %p172, %p173
      %p175 = scmp.ne.s32.totalorder %s163, %s164
      %p176 = scmp.eq.s32.totalorder %s28, 1
      %p177 = por %p175, %p176
      %p179 = scmp.ne.s32.totalorder %s164, %s178
      %p180 = scmp.eq.s32.totalorder %s28, 0
      %p181 = por %p179, %p180
      %s183 = sadd.s32 %s182, 1
      %p186 = scmp.eq.s32.totalorder %s22, 1
      %p187 = scmp.ne.s32.totalorder %s182, %s184
      %p188 = scmp.eq.s32.totalorder %s22, 0
      %p189 = por %p187, %p188
      %p190 = scmp.ne.s32.totalorder %s182, %s184
      %p191 = scmp.eq.s32.totalorder %s27, 1
      %p192 = por %p190, %p191
      %p193 = scmp.ne.s32.totalorder %s184, %s185
      %p194 = scmp.eq.s32.totalorder %s27, 0
      %p195 = por %p193, %p194
      %p196 = scmp.ne.s32.totalorder %s184, %s185
      %p197 = scmp.eq.s32.totalorder %s28, 1
      %p198 = por %p196, %p197
      %p200 = scmp.ne.s32.totalorder %s185, %s199
      %p201 = scmp.eq.s32.totalorder %s28, 0
      %p202 = por %p200, %p201
      %s204 = sadd.s32 %s203, 1
      %p207 = scmp.eq.s32.totalorder %s22, 1
      %p208 = scmp.ne.s32.totalorder %s203, %s205
      %p209 = scmp.eq.s32.totalorder %s22, 0
      %p210 = por %p208, %p209
      %p211 = scmp.ne.s32.totalorder %s203, %s205
      %p212 = scmp.eq.s32.totalorder %s27, 1
      %p213 = por %p211, %p212
      %p214 = scmp.ne.s32.totalorder %s205, %s206
      %p215 = scmp.eq.s32.totalorder %s27, 0
      %p216 = por %p214, %p215
      %p217 = scmp.ne.s32.totalorder %s205, %s206
      %p218 = scmp.eq.s32.totalorder %s28, 1
      %p219 = por %p217, %p218
      %p221 = scmp.ne.s32.totalorder %s206, %s220
      %p222 = scmp.eq.s32.totalorder %s28, 0
      %p223 = por %p221, %p222
      %s225 = sadd.s32 %s224, 1
      %p228 = scmp.eq.s32.totalorder %s22, 1
      %p229 = scmp.ne.s32.totalorder %s224, %s226
      %p230 = scmp.eq.s32.totalorder %s22, 0
      %p231 = por %p229, %p230
      %p232 = scmp.ne.s32.totalorder %s224, %s226
      %p233 = scmp.eq.s32.totalorder %s27, 1
      %p234 = por %p232, %p233
      %p235 = scmp.ne.s32.totalorder %s226, %s227
      %p236 = scmp.eq.s32.totalorder %s27, 0
      %p237 = por %p235, %p236
      %p238 = scmp.ne.s32.totalorder %s226, %s227
      %p239 = scmp.eq.s32.totalorder %s28, 1
      %p240 = por %p238, %p239
      %p242 = scmp.ne.s32.totalorder %s227, %s241
      %p243 = scmp.eq.s32.totalorder %s28, 0
      %p244 = por %p242, %p243
      %s246 = sadd.s32 %s245, 1
      %p249 = scmp.eq.s32.totalorder %s22, 1
      %p250 = scmp.ne.s32.totalorder %s245, %s247
      %p251 = scmp.eq.s32.totalorder %s22, 0
      %p252 = por %p250, %p251
      %p253 = scmp.ne.s32.totalorder %s245, %s247
      %p254 = scmp.eq.s32.totalorder %s27, 1
      %p255 = por %p253, %p254
      %p256 = scmp.ne.s32.totalorder %s247, %s248
      %p257 = scmp.eq.s32.totalorder %s27, 0
      %p258 = por %p256, %p257
      %p259 = scmp.ne.s32.totalorder %s247, %s248
      %p260 = scmp.eq.s32.totalorder %s28, 1
      %p261 = por %p259, %p260
      %p263 = scmp.ne.s32.totalorder %s248, %s262
      %p264 = scmp.eq.s32.totalorder %s28, 0
      %p265 = por %p263, %p264
      %s266 = ssub.s32 %s22, %s29
      %p267 = scmp.eq.s32.totalorder %s266, 0
      %s269 = sadd.s32 %s268, 1
      %s270 = scalar_select %p267, %s268, %s269
      %p273 = pneg %p267
      %p274 = scmp.eq.s32.totalorder %s22, 1
      %p275 = por %p273, %p274
      %p276 = scmp.ne.s32.totalorder %s268, %s271
      %p277 = scmp.eq.s32.totalorder %s22, 0
      %p278 = por %p276, %p277
      %p279 = scmp.ne.s32.totalorder %s268, %s271
      %p280 = scmp.eq.s32.totalorder %s27, 1
      %p281 = por %p279, %p280
      %p282 = scmp.ne.s32.totalorder %s271, %s272
      %p283 = scmp.eq.s32.totalorder %s27, 0
      %p284 = por %p282, %p283
      %p285 = scmp.ne.s32.totalorder %s271, %s272
      %p286 = scmp.eq.s32.totalorder %s28, 1
      %p287 = por %p285, %p286
      %p289 = scmp.ne.s32.totalorder %s272, %s288
      %p290 = scmp.eq.s32.totalorder %s28, 0
      %p291 = por %p289, %p290
      %p292 = scmp.le.s32.totalorder 1, %s22
      %p293 = scmp.lt.s32.totalorder %s22, 3
      %p294 = pnand %p292, %p293
      %p295 = pneg %p294
      // Predicated region
      $region9: #{tpu_custom_call.1} parent=5 // pred_check
        _
      $region10: #{tpu_custom_call.1} parent=5 // pred_check_branch
        %297 = sbr.rel (%p294) target = $region12
      $region11: #{tpu_custom_call.1} parent=5 // pred_region
        %s298 = ssub.s32 %s22, 1
        // Predicated region
        $region13: #{tpu_custom_call.1} parent=11 // pred_check
          %p299 = pneg %p69
        $region14: #{tpu_custom_call.1} parent=11 // pred_check_branch
          %301 = sbr.rel (%p299) target = $region16
        $region15: #{tpu_custom_call.1} parent=11 // pred_region
          _
        $region16: #{tpu_custom_call.1} parent=11 // pred_fallthru
          _
        // Predicated region
        $region17: #{tpu_custom_call.1} parent=11 // pred_check
          %p302 = pneg %p90
        $region18: #{tpu_custom_call.1} parent=11 // pred_check_branch
          %304 = sbr.rel (%p302) target = $region20
        $region19: #{tpu_custom_call.1} parent=11 // pred_region
          _
        $region20: #{tpu_custom_call.1} parent=11 // pred_fallthru
          _
        // Predicated region
        $region21: #{tpu_custom_call.1} parent=11 // pred_check
          %p305 = pneg %p111
        $region22: #{tpu_custom_call.1} parent=11 // pred_check_branch
          %307 = sbr.rel (%p305) target = $region24
        $region23: #{tpu_custom_call.1} parent=11 // pred_region
          _
        $region24: #{tpu_custom_call.1} parent=11 // pred_fallthru
          _
        // Predicated region
        $region25: #{tpu_custom_call.1} parent=11 // pred_check
          %p308 = pneg %p132
        $region26: #{tpu_custom_call.1} parent=11 // pred_check_branch
          %310 = sbr.rel (%p308) target = $region28
        $region27: #{tpu_custom_call.1} parent=11 // pred_region
          _
        $region28: #{tpu_custom_call.1} parent=11 // pred_fallthru
          _
        // Predicated region
        $region29: #{tpu_custom_call.1} parent=11 // pred_check
          %p311 = pneg %p153
        $region30: #{tpu_custom_call.1} parent=11 // pred_check_branch
          %313 = sbr.rel (%p311) target = $region32
        $region31: #{tpu_custom_call.1} parent=11 // pred_region
          _
        $region32: #{tpu_custom_call.1} parent=11 // pred_fallthru
          _
        // Predicated region
        $region33: #{tpu_custom_call.1} parent=11 // pred_check
          %p314 = pneg %p174
        $region34: #{tpu_custom_call.1} parent=11 // pred_check_branch
          %316 = sbr.rel (%p314) target = $region36
        $region35: #{tpu_custom_call.1} parent=11 // pred_region
          _
        $region36: #{tpu_custom_call.1} parent=11 // pred_fallthru
          _
        // Predicated region
        $region37: #{tpu_custom_call.1} parent=11 // pred_check
          %p317 = pneg %p195
        $region38: #{tpu_custom_call.1} parent=11 // pred_check_branch
          %319 = sbr.rel (%p317) target = $region40
        $region39: #{tpu_custom_call.1} parent=11 // pred_region
          _
        $region40: #{tpu_custom_call.1} parent=11 // pred_fallthru
          _
        // Predicated region
        $region41: #{tpu_custom_call.1} parent=11 // pred_check
          %p320 = pneg %p216
        $region42: #{tpu_custom_call.1} parent=11 // pred_check_branch
          %322 = sbr.rel (%p320) target = $region44
        $region43: #{tpu_custom_call.1} parent=11 // pred_region
          _
        $region44: #{tpu_custom_call.1} parent=11 // pred_fallthru
          _
        // Predicated region
        $region45: #{tpu_custom_call.1} parent=11 // pred_check
          %p323 = pneg %p237
        $region46: #{tpu_custom_call.1} parent=11 // pred_check_branch
          %325 = sbr.rel (%p323) target = $region48
        $region47: #{tpu_custom_call.1} parent=11 // pred_region
          _
        $region48: #{tpu_custom_call.1} parent=11 // pred_fallthru
          _
        // Predicated region
        $region49: #{tpu_custom_call.1} parent=11 // pred_check
          %p326 = pneg %p258
        $region50: #{tpu_custom_call.1} parent=11 // pred_check_branch
          %328 = sbr.rel (%p326) target = $region52
        $region51: #{tpu_custom_call.1} parent=11 // pred_region
          _
        $region52: #{tpu_custom_call.1} parent=11 // pred_fallthru
          _
      $region12: #{tpu_custom_call.1} parent=5 // pred_fallthru
        _
      %p329 = scmp.lt.s32.totalorder %s22, 2
      // Predicated region
      $region53: #{tpu_custom_call.1} parent=5 // pred_check
        %p330 = pneg %p329
      $region54: #{tpu_custom_call.1} parent=5 // pred_check_branch
        %332 = sbr.rel (%p330) target = $region56
      $region55: #{tpu_custom_call.1} parent=5 // pred_region
        // Predicated region
        $region57: #{tpu_custom_call.1} parent=55 // pred_check
          %p333 = pneg %p42
        $region58: #{tpu_custom_call.1} parent=55 // pred_check_branch
          %335 = sbr.rel (%p333) target = $region60
        $region59: #{tpu_custom_call.1} parent=55 // pred_region
          %p336 = scmp.lt.s32.totalorder %s22, 1
          %s337 = scalar_select %p336, %s22, 1
          %s338 = smul.addr %s337, 2
          %s339 = scalar_lea.vmem %s0, %s338
        $region60: #{tpu_custom_call.1} parent=55 // pred_fallthru
          _
      $region56: #{tpu_custom_call.1} parent=5 // pred_fallthru
        _
      %p340 = scmp.le.s32.totalorder 1, %s22
      %p341 = scmp.lt.s32.totalorder %s22, 3
      %p342 = pnand %p340, %p341
      %p343 = pneg %p342
      // Predicated region
      $region61: #{tpu_custom_call.1} parent=5 // pred_check
        _
      $region62: #{tpu_custom_call.1} parent=5 // pred_check_branch
        %345 = sbr.rel (%p342) target = $region64
      $region63: #{tpu_custom_call.1} parent=5 // pred_region
        %s346 = ssub.s32 %s22, 1
        %p347 = scmp.lt.s32.totalorder %s27, 1
        %s348 = scalar_select %p347, %s27, 1
        %s349 = smul.addr %s348, 2
        %s350 = scalar_lea.vmem %s0, %s349
        %p351 = pneg %p48
        %p352 = pneg %p45
        %p353 = pneg %p69
        %p354 = pneg %p66
        %p355 = pneg %p90
        %p356 = pneg %p87
        %p357 = pneg %p111
        %p358 = pneg %p108
        %p359 = pneg %p132
        %p360 = pneg %p129
        %p361 = pneg %p153
        %p362 = pneg %p150
        %p363 = pneg %p174
        %p364 = pneg %p171
        %p365 = pneg %p195
        %p366 = pneg %p192
        %p367 = pneg %p216
        %p368 = pneg %p213
        %p369 = pneg %p237
        %p370 = pneg %p234
        %p371 = pneg %p258
        %p372 = pneg %p255
        %p373 = pneg %p284
        %p374 = pneg %p281
        %s375 = sand.u32 %s271, 1
        %s376 = scalar_lea.sflag [#allocation4], %s375
        %s377 = sand.u32 %s271, 1
        %s378 = scalar_lea.vmem [#allocation3], %s377
        %p379 = scmp.lt.s32.totalorder %s27, 1
        %s380 = scalar_select %p379, %s27, 1
        %s381 = smul.addr %s380, 2
        %s382 = scalar_lea.vmem %s0, %s381
        %v384 = vld [vmem:[%s382] sm:$0x3]
        %v385 = vld [vmem:[%s1] sm:$0xff]
        %v386 = vld [vmem:[%s1 + $0x8] sm:$0xff]
        %v387 = vld [vmem:[%s1 + $0x10] sm:$0xff]
        %v388 = vld [vmem:[%s1 + $0x18] sm:$0xff]
        %390 = vset.pattern.permute.xlu0 0
        %391 = vperm.xlu0 %390, %v385
        %v392 = vpop.permute.xlu0 %391
        %395 = vset.pattern.permute.xlu0 0
        %396 = vperm.xlu0 %395, %v386
        %v397 = vpop.permute.xlu0 %396
        %400 = vset.pattern.permute.xlu0 0
        %401 = vperm.xlu0 %400, %v387
        %v402 = vpop.permute.xlu0 %401
        %405 = vset.pattern.permute.xlu0 0
        %406 = vperm.xlu0 %405, %v388
        %v407 = vpop.permute.xlu0 %406
        %v409 = vlaneseq
        %v410 = vshrl.u32 %v409, 7
        %v411 = vsub.s32 0, %v410
        %v412 = vrot.slane %v384, %v411
        %v413 = vmul.f32 %v392, %v412
        %v414 = vmul.f32 %v397, %v412
        %v415 = vmul.f32 %v402, %v412
        %v416 = vmul.f32 %v407, %v412
        %417 = vset.pattern.permute.xlu0 1
        %418 = vperm.xlu0 %417, %v385
        %v419 = vpop.permute.xlu0 %418
        %421 = vset.pattern.permute.xlu0 1
        %422 = vperm.xlu0 %421, %v386
        %v423 = vpop.permute.xlu0 %422
        %425 = vset.pattern.permute.xlu0 1
        %426 = vperm.xlu0 %425, %v387
        %v427 = vpop.permute.xlu0 %426
        %429 = vset.pattern.permute.xlu0 1
        %430 = vperm.xlu0 %429, %v388
        %v431 = vpop.permute.xlu0 %430
        %v433 = vlaneseq
        %v434 = vshrl.u32 %v433, 7
        %v435 = vsub.s32 1, %v434
        %v436 = vrot.slane %v384, %v435
        %v437 = vmul.f32 %v419, %v436
        %v438 = vmul.f32 %v423, %v436
        %v439 = vmul.f32 %v427, %v436
        %v440 = vmul.f32 %v431, %v436
        %v441 = vadd.f32 %v413, %v437
        %v442 = vadd.f32 %v414, %v438
        %v443 = vadd.f32 %v415, %v439
        %v444 = vadd.f32 %v416, %v440
        %v445 = vld [vmem:[%s2] sm:$0xff]
        %v446 = vld [vmem:[%s2 + $0x8] sm:$0xff]
        %v447 = vld [vmem:[%s2 + $0x10] sm:$0xff]
        %v448 = vld [vmem:[%s2 + $0x18] sm:$0xff]
        %450 = vset.pattern.permute.xlu0 0
        %451 = vperm.xlu0 %450, %v445
        %v452 = vpop.permute.xlu0 %451
        %455 = vset.pattern.permute.xlu0 0
        %456 = vperm.xlu0 %455, %v446
        %v457 = vpop.permute.xlu0 %456
        %460 = vset.pattern.permute.xlu0 0
        %461 = vperm.xlu0 %460, %v447
        %v462 = vpop.permute.xlu0 %461
        %465 = vset.pattern.permute.xlu0 0
        %466 = vperm.xlu0 %465, %v448
        %v467 = vpop.permute.xlu0 %466
        %v469 = vadd.f32 %v441, %v452
        %v470 = vadd.f32 %v442, %v457
        %v471 = vadd.f32 %v443, %v462
        %v472 = vadd.f32 %v444, %v467
        %v473 = vmax.f32 %v469, 0.0
        %v474 = vmax.f32 %v470, 0.0
        %v475 = vmax.f32 %v471, 0.0
        %v476 = vmax.f32 %v472, 0.0
        %v477 = vpack.c.bf16 %v474, %v473
        %v478 = vpack.c.bf16 %v476, %v475
        %v479 = vld [vmem:[%s3] sm:$0xf]
        %v480 = vld [vmem:[%s3 + $0x4] sm:$0xf]
        %v481 = vld [vmem:[%s3 + $0x8] sm:$0xf]
        %v482 = vld [vmem:[%s3 + $0xc] sm:$0xf]
        %v483 = vld [vmem:[%s3 + $0x10] sm:$0xf]
        %v484 = vld [vmem:[%s3 + $0x14] sm:$0xf]
        %v485 = vld [vmem:[%s3 + $0x18] sm:$0xf]
        %v486 = vld [vmem:[%s3 + $0x1c] sm:$0xf]
        %v495 = vunpack.c.l.b16 %v479
        %v496 = vunpack.c.l.b16 %v480
        %v497 = vunpack.c.l.b16 %v481
        %v498 = vunpack.c.l.b16 %v482
        %v499 = vunpack.c.l.b16 %v483
        %v500 = vunpack.c.l.b16 %v484
        %v501 = vunpack.c.l.b16 %v485
        %v502 = vunpack.c.l.b16 %v486
        %v503 = vpack.c.b16 %v496, %v495
        %v504 = vpack.c.b16 %v498, %v497
        %v505 = vpack.c.b16 %v500, %v499
        %v506 = vpack.c.b16 %v502, %v501
        %vm507 = vcmask 261120
        %v509 = vsel %vm507, %v503, 0
        %v512 = vsel %vm507, %v504, 0
        %v515 = vsel %vm507, %v505, 0
        %v518 = vsel %vm507, %v506, 0
        %520 = vmatprep.subr.bf16.mxu0 0
        %521 = vmatpush1.bf16.msra.mxu0 %v477
        %522 = vmatprep.subr.bf16.mxu0 0
        %523 = vmatpush1.bf16.msra.mxu0 %v478
        %524 = vmatprep.subr.bf16.mxu0 0
        %525 = vmatpush1.bf16.msra.mxu0 0
        %526 = vmatprep.subr.bf16.mxu0 0
        %527 = vmatpush1.bf16.msra.mxu0 0
        %528 = vmatprep.subr.bf16.mxu0 0
        %529 = vmatpush1.bf16.msra.mxu0 0
        %530 = vmatprep.subr.bf16.mxu0 0
        %531 = vmatpush1.bf16.msra.mxu0 0
        %532 = vmatprep.subr.bf16.mxu0 0
        %533 = vmatpush1.bf16.msra.mxu0 0
        %534 = vmatprep.subr.bf16.mxu0 0
        %535 = vmatpush1.bf16.msra.mxu0 0
        %536 = vmatprep.subr.bf16.mxu0 0
        %537 = vmatpush1.bf16.msra.mxu0 0
        %538 = vmatprep.subr.bf16.mxu0 0
        %539 = vmatpush1.bf16.msra.mxu0 0
        %540 = vmatprep.subr.bf16.mxu0 0
        %541 = vmatpush1.bf16.msra.mxu0 0
        %542 = vmatprep.subr.bf16.mxu0 0
        %543 = vmatpush1.bf16.msra.mxu0 0
        %544 = vmatprep.subr.bf16.mxu0 0
        %545 = vmatpush1.bf16.msra.mxu0 0
        %546 = vmatprep.subr.bf16.mxu0 0
        %547 = vmatpush1.bf16.msra.mxu0 0
        %548 = vmatprep.subr.bf16.mxu0 0
        %549 = vmatpush1.bf16.msra.mxu0 0
        %550 = vmatprep.subr.bf16.mxu0 0
        %551 = vmatpush1.bf16.msra.mxu0 0
        %552 = vmatprep.mubr.bf16.mxu0 0
        %553 = vmatmul.mubr.bf16.gmra.mrb[0].mxu0 %v509
        %v554 = vpop.f32.mrb[0].mxu0
        %v555 = vadd.f32 0.0, %v554
        %v556 = vpop.f32.mrb[0].mxu0
        %v557 = vpop.f32.mrb[0].mxu0
        %v558 = vadd.f32 0.0, %v557
        %v559 = vpop.f32.mrb[0].mxu0
        %560 = vmatprep.mubr.bf16.mxu0 0
        %561 = vmatmul.mubr.bf16.gmra.mrb[0].mxu0 %v512
        %v562 = vpop.f32.mrb[0].mxu0
        %v563 = vadd.f32 0.0, %v562
        %v564 = vpop.f32.mrb[0].mxu0
        %v565 = vpop.f32.mrb[0].mxu0
        %v566 = vadd.f32 0.0, %v565
        %v567 = vpop.f32.mrb[0].mxu0
        %568 = vmatprep.mubr.bf16.mxu0 0
        %569 = vmatmul.mubr.bf16.gmra.mrb[0].mxu0 %v515
        %v570 = vpop.f32.mrb[0].mxu0
        %v571 = vadd.f32 0.0, %v570
        %v572 = vpop.f32.mrb[0].mxu0
        %v573 = vpop.f32.mrb[0].mxu0
        %v574 = vadd.f32 0.0, %v573
        %v575 = vpop.f32.mrb[0].mxu0
        %576 = vmatprep.mubr.bf16.mxu0 0
        %577 = vmatmul.mubr.bf16.gmra.mrb[0].mxu0 %v518
        %v578 = vpop.f32.mrb[0].mxu0
        %v579 = vadd.f32 0.0, %v578
        %v580 = vpop.f32.mrb[0].mxu0
        %v581 = vpop.f32.mrb[0].mxu0
        %v582 = vadd.f32 0.0, %v581
        %v583 = vpop.f32.mrb[0].mxu0
        %584 = vdwg.mxu0
        %v585 = vpack.c.bf16 %v558, %v555
        %v586 = vpack.c.bf16 %v566, %v563
        %v587 = vpack.c.bf16 %v574, %v571
        %v588 = vpack.c.bf16 %v582, %v579
        %v589 = vld [vmem:[%s4] sm:$0xf]
        %v590 = vld [vmem:[%s4 + $0x4] sm:$0xf]
        %v591 = vld [vmem:[%s4 + $0x8] sm:$0xf]
        %v592 = vld [vmem:[%s4 + $0xc] sm:$0xf]
        %v593 = vld [vmem:[%s4 + $0x10] sm:$0xf]
        %v594 = vld [vmem:[%s4 + $0x14] sm:$0xf]
        %v595 = vld [vmem:[%s4 + $0x18] sm:$0xf]
        %v596 = vld [vmem:[%s4 + $0x1c] sm:$0xf]
        %598 = vset.pattern.permute.xlu0 0
        %599 = vperm.xlu0 %598, %v589
        %v600 = vpop.permute.xlu0 %599
        %v603 = vunpack.c.l.s4 839922192
        %v604 = vunpack.c.0.s8 %v603
        %v605 = vlaneseq
        %v606 = vshrl.u32 %v605, 7
        %v607 = vsub.s32 %v604, %v606
        %v608 = vrot.slane %v600, %v607
        %610 = vset.pattern.permute.xlu0 0
        %611 = vperm.xlu0 %610, %v590
        %v612 = vpop.permute.xlu0 %611
        %v615 = vunpack.c.l.s4 839922192
        %v616 = vunpack.c.0.s8 %v615
        %v617 = vlaneseq
        %v618 = vshrl.u32 %v617, 7
        %v619 = vsub.s32 %v616, %v618
        %v620 = vrot.slane %v612, %v619
        %622 = vset.pattern.permute.xlu0 0
        %623 = vperm.xlu0 %622, %v591
        %v624 = vpop.permute.xlu0 %623
        %v627 = vunpack.c.l.s4 839922192
        %v628 = vunpack.c.0.s8 %v627
        %v629 = vlaneseq
        %v630 = vshrl.u32 %v629, 7
        %v631 = vsub.s32 %v628, %v630
        %v632 = vrot.slane %v624, %v631
        %634 = vset.pattern.permute.xlu0 0
        %635 = vperm.xlu0 %634, %v592
        %v636 = vpop.permute.xlu0 %635
        %v639 = vunpack.c.l.s4 839922192
        %v640 = vunpack.c.0.s8 %v639
        %v641 = vlaneseq
        %v642 = vshrl.u32 %v641, 7
        %v643 = vsub.s32 %v640, %v642
        %v644 = vrot.slane %v636, %v643
        %646 = vset.pattern.permute.xlu0 0
        %647 = vperm.xlu0 %646, %v593
        %v648 = vpop.permute.xlu0 %647
        %v651 = vunpack.c.l.s4 839922192
        %v652 = vunpack.c.0.s8 %v651
        %v653 = vlaneseq
        %v654 = vshrl.u32 %v653, 7
        %v655 = vsub.s32 %v652, %v654
        %v656 = vrot.slane %v648, %v655
        %658 = vset.pattern.permute.xlu0 0
        %659 = vperm.xlu0 %658, %v594
        %v660 = vpop.permute.xlu0 %659
        %v663 = vunpack.c.l.s4 839922192
        %v664 = vunpack.c.0.s8 %v663
        %v665 = vlaneseq
        %v666 = vshrl.u32 %v665, 7
        %v667 = vsub.s32 %v664, %v666
        %v668 = vrot.slane %v660, %v667
        %670 = vset.pattern.permute.xlu0 0
        %671 = vperm.xlu0 %670, %v595
        %v672 = vpop.permute.xlu0 %671
        %v675 = vunpack.c.l.s4 839922192
        %v676 = vunpack.c.0.s8 %v675
        %v677 = vlaneseq
        %v678 = vshrl.u32 %v677, 7
        %v679 = vsub.s32 %v676, %v678
        %v680 = vrot.slane %v672, %v679
        %682 = vset.pattern.permute.xlu0 0
        %683 = vperm.xlu0 %682, %v596
        %v684 = vpop.permute.xlu0 %683
        %v687 = vunpack.c.l.s4 839922192
        %v688 = vunpack.c.0.s8 %v687
        %v689 = vlaneseq
        %v690 = vshrl.u32 %v689, 7
        %v691 = vsub.s32 %v688, %v690
        %v692 = vrot.slane %v684, %v691
        %v701 = vunpack.c.l.b16 %v608
        %v702 = vunpack.c.l.b16 %v620
        %v703 = vunpack.c.l.b16 %v632
        %v704 = vunpack.c.l.b16 %v644
        %v705 = vunpack.c.l.b16 %v656
        %v706 = vunpack.c.l.b16 %v668
        %v707 = vunpack.c.l.b16 %v680
        %v708 = vunpack.c.l.b16 %v692
        %v709 = vpack.c.b16 %v702, %v701
        %v710 = vpack.c.b16 %v704, %v703
        %v711 = vpack.c.b16 %v706, %v705
        %v712 = vpack.c.b16 %v708, %v707
        %v717 = vadd.bf16 %v585, %v709
        %v718 = vadd.bf16 %v586, %v710
        %v719 = vadd.bf16 %v587, %v711
        %v720 = vadd.bf16 %v588, %v712
        %v721 = vmax.bf16 %v717, 0
        %v722 = vmax.bf16 %v718, 0
        %v723 = vmax.bf16 %v719, 0
        %v724 = vmax.bf16 %v720, 0
        %v725 = vld [vmem:[%s5] sm:$0xf]
        %v726 = vld [vmem:[%s5 + $0x4] sm:$0xf]
        %v727 = vld [vmem:[%s5 + $0x8] sm:$0xf]
        %v728 = vld [vmem:[%s5 + $0xc] sm:$0xf]
        %v729 = vld [vmem:[%s5 + $0x10] sm:$0xf]
        %v730 = vld [vmem:[%s5 + $0x14] sm:$0xf]
        %v731 = vld [vmem:[%s5 + $0x18] sm:$0xf]
        %v732 = vld [vmem:[%s5 + $0x1c] sm:$0xf]
        %v733 = vld [vmem:[%s5 + $0x20] sm:$0xf]
        %v734 = vld [vmem:[%s5 + $0x24] sm:$0xf]
        %v735 = vld [vmem:[%s5 + $0x28] sm:$0xf]
        %v736 = vld [vmem:[%s5 + $0x2c] sm:$0xf]
        %v737 = vld [vmem:[%s5 + $0x30] sm:$0xf]
        %v738 = vld [vmem:[%s5 + $0x34] sm:$0xf]
        %v739 = vld [vmem:[%s5 + $0x38] sm:$0xf]
        %v740 = vld [vmem:[%s5 + $0x3c] sm:$0xf]
        %v757 = vunpack.c.l.b16 %v725
        %v758 = vunpack.c.l.b16 %v726
        %v759 = vunpack.c.l.b16 %v727
        %v760 = vunpack.c.l.b16 %v728
        %v761 = vunpack.c.l.b16 %v729
        %v762 = vunpack.c.l.b16 %v730
        %v763 = vunpack.c.l.b16 %v731
        %v764 = vunpack.c.l.b16 %v732
        %v765 = vunpack.c.l.b16 %v733
        %v766 = vunpack.c.l.b16 %v734
        %v767 = vunpack.c.l.b16 %v735
        %v768 = vunpack.c.l.b16 %v736
        %v769 = vunpack.c.l.b16 %v737
        %v770 = vunpack.c.l.b16 %v738
        %v771 = vunpack.c.l.b16 %v739
        %v772 = vunpack.c.l.b16 %v740
        %v773 = vpack.c.b16 %v758, %v757
        %v774 = vpack.c.b16 %v760, %v759
        %v775 = vpack.c.b16 %v762, %v761
        %v776 = vpack.c.b16 %v764, %v763
        %v777 = vpack.c.b16 %v766, %v765
        %v778 = vpack.c.b16 %v768, %v767
        %v779 = vpack.c.b16 %v770, %v769
        %v780 = vpack.c.b16 %v772, %v771
        %vm781 = vcmask 523264
        %v783 = vsel %vm781, %v773, 0
        %v786 = vsel %vm781, %v774, 0
        %v789 = vsel %vm781, %v775, 0
        %v792 = vsel %vm781, %v776, 0
        %v795 = vsel %vm781, %v777, 0
        %v798 = vsel %vm781, %v778, 0
        %v801 = vsel %vm781, %v779, 0
        %v804 = vsel %vm781, %v780, 0
        %806 = vmatprep.subr.bf16.mxu0 0
        %807 = vmatpush1.bf16.msra.mxu0 %v721
        %808 = vmatprep.subr.bf16.mxu0 0
        %809 = vmatpush1.bf16.msra.mxu0 %v722
        %810 = vmatprep.subr.bf16.mxu0 0
        %811 = vmatpush1.bf16.msra.mxu0 %v723
        %812 = vmatprep.subr.bf16.mxu0 0
        %813 = vmatpush1.bf16.msra.mxu0 %v724
        %814 = vmatprep.subr.bf16.mxu0 0
        %815 = vmatpush1.bf16.msra.mxu0 0
        %816 = vmatprep.subr.bf16.mxu0 0
        %817 = vmatpush1.bf16.msra.mxu0 0
        %818 = vmatprep.subr.bf16.mxu0 0
        %819 = vmatpush1.bf16.msra.mxu0 0
        %820 = vmatprep.subr.bf16.mxu0 0
        %821 = vmatpush1.bf16.msra.mxu0 0
        %822 = vmatprep.subr.bf16.mxu0 0
        %823 = vmatpush1.bf16.msra.mxu0 0
        %824 = vmatprep.subr.bf16.mxu0 0
        %825 = vmatpush1.bf16.msra.mxu0 0
        %826 = vmatprep.subr.bf16.mxu0 0
        %827 = vmatpush1.bf16.msra.mxu0 0
        %828 = vmatprep.subr.bf16.mxu0 0
        %829 = vmatpush1.bf16.msra.mxu0 0
        %830 = vmatprep.subr.bf16.mxu0 0
        %831 = vmatpush1.bf16.msra.mxu0 0
        %832 = vmatprep.subr.bf16.mxu0 0
        %833 = vmatpush1.bf16.msra.mxu0 0
        %834 = vmatprep.subr.bf16.mxu0 0
        %835 = vmatpush1.bf16.msra.mxu0 0
        %836 = vmatprep.subr.bf16.mxu0 0
        %837 = vmatpush1.bf16.msra.mxu0 0
        %838 = vmatprep.mubr.bf16.mxu0 0
        %839 = vmatmul.mubr.bf16.gmra.mrb[0].mxu0 %v783
        %v840 = vpop.f32.mrb[0].mxu0
        %v841 = vadd.f32 0.0, %v840
        %v842 = vpop.f32.mrb[0].mxu0
        %v843 = vpop.f32.mrb[0].mxu0
        %v844 = vadd.f32 0.0, %v843
        %v845 = vpop.f32.mrb[0].mxu0
        %846 = vmatprep.mubr.bf16.mxu0 0
        %847 = vmatmul.mubr.bf16.gmra.mrb[0].mxu0 %v786
        %v848 = vpop.f32.mrb[0].mxu0
        %v849 = vadd.f32 0.0, %v848
        %v850 = vpop.f32.mrb[0].mxu0
        %v851 = vpop.f32.mrb[0].mxu0
        %v852 = vadd.f32 0.0, %v851
        %v853 = vpop.f32.mrb[0].mxu0
        %854 = vmatprep.mubr.bf16.mxu0 0
        %855 = vmatmul.mubr.bf16.gmra.mrb[0].mxu0 %v789
        %v856 = vpop.f32.mrb[0].mxu0
        %v857 = vadd.f32 0.0, %v856
        %v858 = vpop.f32.mrb[0].mxu0
        %v859 = vpop.f32.mrb[0].mxu0
        %v860 = vadd.f32 0.0, %v859
        %v861 = vpop.f32.mrb[0].mxu0
        %862 = vmatprep.mubr.bf16.mxu0 0
        %863 = vmatmul.mubr.bf16.gmra.mrb[0].mxu0 %v792
        %v864 = vpop.f32.mrb[0].mxu0
        %v865 = vadd.f32 0.0, %v864
        %v866 = vpop.f32.mrb[0].mxu0
        %v867 = vpop.f32.mrb[0].mxu0
        %v868 = vadd.f32 0.0, %v867
        %v869 = vpop.f32.mrb[0].mxu0
        %870 = vmatprep.mubr.bf16.mxu0 0
        %871 = vmatmul.mubr.bf16.gmra.mrb[0].mxu0 %v795
        %v872 = vpop.f32.mrb[0].mxu0
        %v873 = vadd.f32 0.0, %v872
        %v874 = vpop.f32.mrb[0].mxu0
        %v875 = vpop.f32.mrb[0].mxu0
        %v876 = vadd.f32 0.0, %v875
        %v877 = vpop.f32.mrb[0].mxu0
        %878 = vmatprep.mubr.bf16.mxu0 0
        %879 = vmatmul.mubr.bf16.gmra.mrb[0].mxu0 %v798
        %v880 = vpop.f32.mrb[0].mxu0
        %v881 = vadd.f32 0.0, %v880
        %v882 = vpop.f32.mrb[0].mxu0
        %v883 = vpop.f32.mrb[0].mxu0
        %v884 = vadd.f32 0.0, %v883
        %v885 = vpop.f32.mrb[0].mxu0
        %886 = vmatprep.mubr.bf16.mxu0 0
        %887 = vmatmul.mubr.bf16.gmra.mrb[0].mxu0 %v801
        %v888 = vpop.f32.mrb[0].mxu0
        %v889 = vadd.f32 0.0, %v888
        %v890 = vpop.f32.mrb[0].mxu0
        %v891 = vpop.f32.mrb[0].mxu0
        %v892 = vadd.f32 0.0, %v891
        %v893 = vpop.f32.mrb[0].mxu0
        %894 = vmatprep.mubr.bf16.mxu0 0
        %895 = vmatmul.mubr.bf16.gmra.mrb[0].mxu0 %v804
        %v896 = vpop.f32.mrb[0].mxu0
        %v897 = vadd.f32 0.0, %v896
        %v898 = vpop.f32.mrb[0].mxu0
        %v899 = vpop.f32.mrb[0].mxu0
        %v900 = vadd.f32 0.0, %v899
        %v901 = vpop.f32.mrb[0].mxu0
        %902 = vdwg.mxu0
        %v903 = vpack.c.bf16 %v844, %v841
        %v904 = vpack.c.bf16 %v852, %v849
        %v905 = vpack.c.bf16 %v860, %v857
        %v906 = vpack.c.bf16 %v868, %v865
        %v907 = vpack.c.bf16 %v876, %v873
        %v908 = vpack.c.bf16 %v884, %v881
        %v909 = vpack.c.bf16 %v892, %v889
        %v910 = vpack.c.bf16 %v900, %v897
        %v911 = vld [vmem:[%s6] sm:$0xf]
        %v912 = vld [vmem:[%s6 + $0x4] sm:$0xf]
        %v913 = vld [vmem:[%s6 + $0x8] sm:$0xf]
        %v914 = vld [vmem:[%s6 + $0xc] sm:$0xf]
        %v915 = vld [vmem:[%s6 + $0x10] sm:$0xf]
        %v916 = vld [vmem:[%s6 + $0x14] sm:$0xf]
        %v917 = vld [vmem:[%s6 + $0x18] sm:$0xf]
        %v918 = vld [vmem:[%s6 + $0x1c] sm:$0xf]
        %v919 = vld [vmem:[%s6 + $0x20] sm:$0xf]
        %v920 = vld [vmem:[%s6 + $0x24] sm:$0xf]
        %v921 = vld [vmem:[%s6 + $0x28] sm:$0xf]
        %v922 = vld [vmem:[%s6 + $0x2c] sm:$0xf]
        %v923 = vld [vmem:[%s6 + $0x30] sm:$0xf]
        %v924 = vld [vmem:[%s6 + $0x34] sm:$0xf]
        %v925 = vld [vmem:[%s6 + $0x38] sm:$0xf]
        %v926 = vld [vmem:[%s6 + $0x3c] sm:$0xf]
        %928 = vset.pattern.permute.xlu0 0
        %929 = vperm.xlu0 %928, %v911
        %v930 = vpop.permute.xlu0 %929
        %v933 = vunpack.c.l.s4 839922192
        %v934 = vunpack.c.0.s8 %v933
        %v935 = vlaneseq
        %v936 = vshrl.u32 %v935, 7
        %v937 = vsub.s32 %v934, %v936
        %v938 = vrot.slane %v930, %v937
        %940 = vset.pattern.permute.xlu0 0
        %941 = vperm.xlu0 %940, %v912
        %v942 = vpop.permute.xlu0 %941
        %v945 = vunpack.c.l.s4 839922192
        %v946 = vunpack.c.0.s8 %v945
        %v947 = vlaneseq
        %v948 = vshrl.u32 %v947, 7
        %v949 = vsub.s32 %v946, %v948
        %v950 = vrot.slane %v942, %v949
        %952 = vset.pattern.permute.xlu0 0
        %953 = vperm.xlu0 %952, %v913
        %v954 = vpop.permute.xlu0 %953
        %v957 = vunpack.c.l.s4 839922192
        %v958 = vunpack.c.0.s8 %v957
        %v959 = vlaneseq
        %v960 = vshrl.u32 %v959, 7
        %v961 = vsub.s32 %v958, %v960
        %v962 = vrot.slane %v954, %v961
        %964 = vset.pattern.permute.xlu0 0
        %965 = vperm.xlu0 %964, %v914
        %v966 = vpop.permute.xlu0 %965
        %v969 = vunpack.c.l.s4 839922192
        %v970 = vunpack.c.0.s8 %v969
        %v971 = vlaneseq
        %v972 = vshrl.u32 %v971, 7
        %v973 = vsub.s32 %v970, %v972
        %v974 = vrot.slane %v966, %v973
        %976 = vset.pattern.permute.xlu0 0
        %977 = vperm.xlu0 %976, %v915
        %v978 = vpop.permute.xlu0 %977
        %v981 = vunpack.c.l.s4 839922192
        %v982 = vunpack.c.0.s8 %v981
        %v983 = vlaneseq
        %v984 = vshrl.u32 %v983, 7
        %v985 = vsub.s32 %v982, %v984
        %v986 = vrot.slane %v978, %v985
        %988 = vset.pattern.permute.xlu0 0
        %989 = vperm.xlu0 %988, %v916
        %v990 = vpop.permute.xlu0 %989
        %v993 = vunpack.c.l.s4 839922192
        %v994 = vunpack.c.0.s8 %v993
        %v995 = vlaneseq
        %v996 = vshrl.u32 %v995, 7
        %v997 = vsub.s32 %v994, %v996
        %v998 = vrot.slane %v990, %v997
        %1000 = vset.pattern.permute.xlu0 0
        %1001 = vperm.xlu0 %1000, %v917
        %v1002 = vpop.permute.xlu0 %1001
        %v1005 = vunpack.c.l.s4 839922192
        %v1006 = vunpack.c.0.s8 %v1005
        %v1007 = vlaneseq
        %v1008 = vshrl.u32 %v1007, 7
        %v1009 = vsub.s32 %v1006, %v1008
        %v1010 = vrot.slane %v1002, %v1009
        %1012 = vset.pattern.permute.xlu0 0
        %1013 = vperm.xlu0 %1012, %v918
        %v1014 = vpop.permute.xlu0 %1013
        %v1017 = vunpack.c.l.s4 839922192
        %v1018 = vunpack.c.0.s8 %v1017
        %v1019 = vlaneseq
        %v1020 = vshrl.u32 %v1019, 7
        %v1021 = vsub.s32 %v1018, %v1020
        %v1022 = vrot.slane %v1014, %v1021
        %1024 = vset.pattern.permute.xlu0 0
        %1025 = vperm.xlu0 %1024, %v919
        %v1026 = vpop.permute.xlu0 %1025
        %v1029 = vunpack.c.l.s4 839922192
        %v1030 = vunpack.c.0.s8 %v1029
        %v1031 = vlaneseq
        %v1032 = vshrl.u32 %v1031, 7
        %v1033 = vsub.s32 %v1030, %v1032
        %v1034 = vrot.slane %v1026, %v1033
        %1036 = vset.pattern.permute.xlu0 0
        %1037 = vperm.xlu0 %1036, %v920
        %v1038 = vpop.permute.xlu0 %1037
        %v1041 = vunpack.c.l.s4 839922192
        %v1042 = vunpack.c.0.s8 %v1041
        %v1043 = vlaneseq
        %v1044 = vshrl.u32 %v1043, 7
        %v1045 = vsub.s32 %v1042, %v1044
        %v1046 = vrot.slane %v1038, %v1045
        %1048 = vset.pattern.permute.xlu0 0
        %1049 = vperm.xlu0 %1048, %v921
        %v1050 = vpop.permute.xlu0 %1049
        %v1053 = vunpack.c.l.s4 839922192
        %v1054 = vunpack.c.0.s8 %v1053
        %v1055 = vlaneseq
        %v1056 = vshrl.u32 %v1055, 7
        %v1057 = vsub.s32 %v1054, %v1056
        %v1058 = vrot.slane %v1050, %v1057
        %1060 = vset.pattern.permute.xlu0 0
        %1061 = vperm.xlu0 %1060, %v922
        %v1062 = vpop.permute.xlu0 %1061
        %v1065 = vunpack.c.l.s4 839922192
        %v1066 = vunpack.c.0.s8 %v1065
        %v1067 = vlaneseq
        %v1068 = vshrl.u32 %v1067, 7
        %v1069 = vsub.s32 %v1066, %v1068
        %v1070 = vrot.slane %v1062, %v1069
        %1072 = vset.pattern.permute.xlu0 0
        %1073 = vperm.xlu0 %1072, %v923
        %v1074 = vpop.permute.xlu0 %1073
        %v1077 = vunpack.c.l.s4 839922192
        %v1078 = vunpack.c.0.s8 %v1077
        %v1079 = vlaneseq
        %v1080 = vshrl.u32 %v1079, 7
        %v1081 = vsub.s32 %v1078, %v1080
        %v1082 = vrot.slane %v1074, %v1081
        %1084 = vset.pattern.permute.xlu0 0
        %1085 = vperm.xlu0 %1084, %v924
        %v1086 = vpop.permute.xlu0 %1085
        %v1089 = vunpack.c.l.s4 839922192
        %v1090 = vunpack.c.0.s8 %v1089
        %v1091 = vlaneseq
        %v1092 = vshrl.u32 %v1091, 7
        %v1093 = vsub.s32 %v1090, %v1092
        %v1094 = vrot.slane %v1086, %v1093
        %1096 = vset.pattern.permute.xlu0 0
        %1097 = vperm.xlu0 %1096, %v925
        %v1098 = vpop.permute.xlu0 %1097
        %v1101 = vunpack.c.l.s4 839922192
        %v1102 = vunpack.c.0.s8 %v1101
        %v1103 = vlaneseq
        %v1104 = vshrl.u32 %v1103, 7
        %v1105 = vsub.s32 %v1102, %v1104
        %v1106 = vrot.slane %v1098, %v1105
        %1108 = vset.pattern.permute.xlu0 0
        %1109 = vperm.xlu0 %1108, %v926
        %v1110 = vpop.permute.xlu0 %1109
        %v1113 = vunpack.c.l.s4 839922192
        %v1114 = vunpack.c.0.s8 %v1113
        %v1115 = vlaneseq
        %v1116 = vshrl.u32 %v1115, 7
        %v1117 = vsub.s32 %v1114, %v1116
        %v1118 = vrot.slane %v1110, %v1117
        %v1135 = vunpack.c.l.b16 %v938
        %v1136 = vunpack.c.l.b16 %v950
        %v1137 = vunpack.c.l.b16 %v962
        %v1138 = vunpack.c.l.b16 %v974
        %v1139 = vunpack.c.l.b16 %v986
        %v1140 = vunpack.c.l.b16 %v998
        %v1141 = vunpack.c.l.b16 %v1010
        %v1142 = vunpack.c.l.b16 %v1022
        %v1143 = vunpack.c.l.b16 %v1034
        %v1144 = vunpack.c.l.b16 %v1046
        %v1145 = vunpack.c.l.b16 %v1058
        %v1146 = vunpack.c.l.b16 %v1070
        %v1147 = vunpack.c.l.b16 %v1082
        %v1148 = vunpack.c.l.b16 %v1094
        %v1149 = vunpack.c.l.b16 %v1106
        %v1150 = vunpack.c.l.b16 %v1118
        %v1151 = vpack.c.b16 %v1136, %v1135
        %v1152 = vpack.c.b16 %v1138, %v1137
        %v1153 = vpack.c.b16 %v1140, %v1139
        %v1154 = vpack.c.b16 %v1142, %v1141
        %v1155 = vpack.c.b16 %v1144, %v1143
        %v1156 = vpack.c.b16 %v1146, %v1145
        %v1157 = vpack.c.b16 %v1148, %v1147
        %v1158 = vpack.c.b16 %v1150, %v1149
        %v1167 = vadd.bf16 %v903, %v1151
        %v1168 = vadd.bf16 %v904, %v1152
        %v1169 = vadd.bf16 %v905, %v1153
        %v1170 = vadd.bf16 %v906, %v1154
        %v1171 = vadd.bf16 %v907, %v1155
        %v1172 = vadd.bf16 %v908, %v1156
        %v1173 = vadd.bf16 %v909, %v1157
        %v1174 = vadd.bf16 %v910, %v1158
        %v1175 = vmax.bf16 %v1167, 0
        %v1176 = vmax.bf16 %v1168, 0
        %v1177 = vmax.bf16 %v1169, 0
        %v1178 = vmax.bf16 %v1170, 0
        %v1179 = vmax.bf16 %v1171, 0
        %v1180 = vmax.bf16 %v1172, 0
        %v1181 = vmax.bf16 %v1173, 0
        %v1182 = vmax.bf16 %v1174, 0
        %v1183 = vld [vmem:[%s7] sm:$0xf]
        %v1184 = vld [vmem:[%s7 + $0x4] sm:$0xf]
        %v1185 = vld [vmem:[%s7 + $0x8] sm:$0xf]
        %v1186 = vld [vmem:[%s7 + $0xc] sm:$0xf]
        %v1187 = vld [vmem:[%s7 + $0x10] sm:$0xf]
        %v1188 = vld [vmem:[%s7 + $0x14] sm:$0xf]
        %v1189 = vld [vmem:[%s7 + $0x18] sm:$0xf]
        %v1190 = vld [vmem:[%s7 + $0x1c] sm:$0xf]
        %v1191 = vld [vmem:[%s7 + $0x20] sm:$0xf]
        %v1192 = vld [vmem:[%s7 + $0x24] sm:$0xf]
        %v1193 = vld [vmem:[%s7 + $0x28] sm:$0xf]
        %v1194 = vld [vmem:[%s7 + $0x2c] sm:$0xf]
        %v1195 = vld [vmem:[%s7 + $0x30] sm:$0xf]
        %v1196 = vld [vmem:[%s7 + $0x34] sm:$0xf]
        %v1197 = vld [vmem:[%s7 + $0x38] sm:$0xf]
        %v1198 = vld [vmem:[%s7 + $0x3c] sm:$0xf]
        %v1199 = vld [vmem:[%s7 + $0x40] sm:$0xf]
        %v1200 = vld [vmem:[%s7 + $0x44] sm:$0xf]
        %v1201 = vld [vmem:[%s7 + $0x48] sm:$0xf]
        %v1202 = vld [vmem:[%s7 + $0x4c] sm:$0xf]
        %v1203 = vld [vmem:[%s7 + $0x50] sm:$0xf]
        %v1204 = vld [vmem:[%s7 + $0x54] sm:$0xf]
        %v1205 = vld [vmem:[%s7 + $0x58] sm:$0xf]
        %v1206 = vld [vmem:[%s7 + $0x5c] sm:$0xf]
        %v1207 = vld [vmem:[%s7 + $0x60] sm:$0xf]
        %v1208 = vld [vmem:[%s7 + $0x64] sm:$0xf]
        %v1209 = vld [vmem:[%s7 + $0x68] sm:$0xf]
        %v1210 = vld [vmem:[%s7 + $0x6c] sm:$0xf]
        %v1211 = vld [vmem:[%s7 + $0x70] sm:$0xf]
        %v1212 = vld [vmem:[%s7 + $0x74] sm:$0xf]
        %v1213 = vld [vmem:[%s7 + $0x78] sm:$0xf]
        %v1214 = vld [vmem:[%s7 + $0x7c] sm:$0xf]
        %v1247 = vunpack.c.l.b16 %v1183
        %v1248 = vunpack.c.l.b16 %v1184
        %v1249 = vunpack.c.l.b16 %v1185
        %v1250 = vunpack.c.l.b16 %v1186
        %v1251 = vunpack.c.l.b16 %v1187
        %v1252 = vunpack.c.l.b16 %v1188
        %v1253 = vunpack.c.l.b16 %v1189
        %v1254 = vunpack.c.l.b16 %v1190
        %v1255 = vunpack.c.l.b16 %v1191
        %v1256 = vunpack.c.l.b16 %v1192
        %v1257 = vunpack.c.l.b16 %v1193
        %v1258 = vunpack.c.l.b16 %v1194
        %v1259 = vunpack.c.l.b16 %v1195
        %v1260 = vunpack.c.l.b16 %v1196
        %v1261 = vunpack.c.l.b16 %v1197
        %v1262 = vunpack.c.l.b16 %v1198
        %v1263 = vunpack.c.l.b16 %v1199
        %v1264 = vunpack.c.l.b16 %v1200
        %v1265 = vunpack.c.l.b16 %v1201
        %v1266 = vunpack.c.l.b16 %v1202
        %v1267 = vunpack.c.l.b16 %v1203
        %v1268 = vunpack.c.l.b16 %v1204
        %v1269 = vunpack.c.l.b16 %v1205
        %v1270 = vunpack.c.l.b16 %v1206
        %v1271 = vunpack.c.l.b16 %v1207
        %v1272 = vunpack.c.l.b16 %v1208
        %v1273 = vunpack.c.l.b16 %v1209
        %v1274 = vunpack.c.l.b16 %v1210
        %v1275 = vunpack.c.l.b16 %v1211
        %v1276 = vunpack.c.l.b16 %v1212
        %v1277 = vunpack.c.l.b16 %v1213
        %v1278 = vunpack.c.l.b16 %v1214
        %v1279 = vpack.c.b16 %v1248, %v1247
        %v1280 = vpack.c.b16 %v1250, %v1249
        %v1281 = vpack.c.b16 %v1252, %v1251
        %v1282 = vpack.c.b16 %v1254, %v1253
        %v1283 = vpack.c.b16 %v1256, %v1255
        %v1284 = vpack.c.b16 %v1258, %v1257
        %v1285 = vpack.c.b16 %v1260, %v1259
        %v1286 = vpack.c.b16 %v1262, %v1261
        %v1287 = vpack.c.b16 %v1264, %v1263
        %v1288 = vpack.c.b16 %v1266, %v1265
        %v1289 = vpack.c.b16 %v1268, %v1267
        %v1290 = vpack.c.b16 %v1270, %v1269
        %v1291 = vpack.c.b16 %v1272, %v1271
        %v1292 = vpack.c.b16 %v1274, %v1273
        %v1293 = vpack.c.b16 %v1276, %v1275
        %v1294 = vpack.c.b16 %v1278, %v1277
        %1311 = vmatprep.subr.bf16.mxu0 0
        %1312 = vmatpush1.bf16.msra.mxu0 %v1175
        %1313 = vmatprep.subr.bf16.mxu0 0
        %1314 = vmatpush1.bf16.msra.mxu0 %v1176
        %1315 = vmatprep.subr.bf16.mxu0 0
        %1316 = vmatpush1.bf16.msra.mxu0 %v1177
        %1317 = vmatprep.subr.bf16.mxu0 0
        %1318 = vmatpush1.bf16.msra.mxu0 %v1178
        %1319 = vmatprep.subr.bf16.mxu0 0
        %1320 = vmatpush1.bf16.msra.mxu0 %v1179
        %1321 = vmatprep.subr.bf16.mxu0 0
        %1322 = vmatpush1.bf16.msra.mxu0 %v1180
        %1323 = vmatprep.subr.bf16.mxu0 0
        %1324 = vmatpush1.bf16.msra.mxu0 %v1181
        %1325 = vmatprep.subr.bf16.mxu0 0
        %1326 = vmatpush1.bf16.msra.mxu0 %v1182
        %1327 = vmatprep.subr.bf16.mxu0 0
        %1328 = vmatpush1.bf16.msra.mxu0 0
        %1329 = vmatprep.subr.bf16.mxu0 0
        %1330 = vmatpush1.bf16.msra.mxu0 0
        %1331 = vmatprep.subr.bf16.mxu0 0
        %1332 = vmatpush1.bf16.msra.mxu0 0
        %1333 = vmatprep.subr.bf16.mxu0 0
        %1334 = vmatpush1.bf16.msra.mxu0 0
        %1335 = vmatprep.subr.bf16.mxu0 0
        %1336 = vmatpush1.bf16.msra.mxu0 0
        %1337 = vmatprep.subr.bf16.mxu0 0
        %1338 = vmatpush1.bf16.msra.mxu0 0
        %1339 = vmatprep.subr.bf16.mxu0 0
        %1340 = vmatpush1.bf16.msra.mxu0 0
        %1341 = vmatprep.subr.bf16.mxu0 0
        %1342 = vmatpush1.bf16.msra.mxu0 0
        %1343 = vmatprep.mubr.bf16.mxu0 0
        %1344 = vmatmul.mubr.bf16.gmra.mrb[0].mxu0 %v1279
        %v1345 = vpop.f32.mrb[0].mxu0
        %v1346 = vadd.f32 0.0, %v1345
        %v1347 = vpop.f32.mrb[0].mxu0
        %v1348 = vpop.f32.mrb[0].mxu0
        %v1349 = vadd.f32 0.0, %v1348
        %v1350 = vpop.f32.mrb[0].mxu0
        %1351 = vmatprep.mubr.bf16.mxu0 0
        %1352 = vmatmul.mubr.bf16.gmra.mrb[0].mxu0 %v1280
        %v1353 = vpop.f32.mrb[0].mxu0
        %v1354 = vadd.f32 0.0, %v1353
        %v1355 = vpop.f32.mrb[0].mxu0
        %v1356 = vpop.f32.mrb[0].mxu0
        %v1357 = vadd.f32 0.0, %v1356
        %v1358 = vpop.f32.mrb[0].mxu0
        %1359 = vmatprep.mubr.bf16.mxu0 0
        %1360 = vmatmul.mubr.bf16.gmra.mrb[0].mxu0 %v1281
        %v1361 = vpop.f32.mrb[0].mxu0
        %v1362 = vadd.f32 0.0, %v1361
        %v1363 = vpop.f32.mrb[0].mxu0
        %v1364 = vpop.f32.mrb[0].mxu0
        %v1365 = vadd.f32 0.0, %v1364
        %v1366 = vpop.f32.mrb[0].mxu0
        %1367 = vmatprep.mubr.bf16.mxu0 0
        %1368 = vmatmul.mubr.bf16.gmra.mrb[0].mxu0 %v1282
        %v1369 = vpop.f32.mrb[0].mxu0
        %v1370 = vadd.f32 0.0, %v1369
        %v1371 = vpop.f32.mrb[0].mxu0
        %v1372 = vpop.f32.mrb[0].mxu0
        %v1373 = vadd.f32 0.0, %v1372
        %v1374 = vpop.f32.mrb[0].mxu0
        %1375 = vmatprep.mubr.bf16.mxu0 0
        %1376 = vmatmul.mubr.bf16.gmra.mrb[0].mxu0 %v1283
        %v1377 = vpop.f32.mrb[0].mxu0
        %v1378 = vadd.f32 0.0, %v1377
        %v1379 = vpop.f32.mrb[0].mxu0
        %v1380 = vpop.f32.mrb[0].mxu0
        %v1381 = vadd.f32 0.0, %v1380
        %v1382 = vpop.f32.mrb[0].mxu0
        %1383 = vmatprep.mubr.bf16.mxu0 0
        %1384 = vmatmul.mubr.bf16.gmra.mrb[0].mxu0 %v1284
        %v1385 = vpop.f32.mrb[0].mxu0
        %v1386 = vadd.f32 0.0, %v1385
        %v1387 = vpop.f32.mrb[0].mxu0
        %v1388 = vpop.f32.mrb[0].mxu0
        %v1389 = vadd.f32 0.0, %v1388
        %v1390 = vpop.f32.mrb[0].mxu0
        %1391 = vmatprep.mubr.bf16.mxu0 0
        %1392 = vmatmul.mubr.bf16.gmra.mrb[0].mxu0 %v1285
        %v1393 = vpop.f32.mrb[0].mxu0
        %v1394 = vadd.f32 0.0, %v1393
        %v1395 = vpop.f32.mrb[0].mxu0
        %v1396 = vpop.f32.mrb[0].mxu0
        %v1397 = vadd.f32 0.0, %v1396
        %v1398 = vpop.f32.mrb[0].mxu0
        %1399 = vmatprep.mubr.bf16.mxu0 0
        %1400 = vmatmul.mubr.bf16.gmra.mrb[0].mxu0 %v1286
        %v1401 = vpop.f32.mrb[0].mxu0
        %v1402 = vadd.f32 0.0, %v1401
        %v1403 = vpop.f32.mrb[0].mxu0
        %v1404 = vpop.f32.mrb[0].mxu0
        %v1405 = vadd.f32 0.0, %v1404
        %v1406 = vpop.f32.mrb[0].mxu0
        %1407 = vmatprep.mubr.bf16.mxu0 0
        %1408 = vmatmul.mubr.bf16.gmra.mrb[0].mxu0 %v1287
        %v1409 = vpop.f32.mrb[0].mxu0
        %v1410 = vadd.f32 0.0, %v1409
        %v1411 = vpop.f32.mrb[0].mxu0
        %v1412 = vpop.f32.mrb[0].mxu0
        %v1413 = vadd.f32 0.0, %v1412
        %v1414 = vpop.f32.mrb[0].mxu0
        %1415 = vmatprep.mubr.bf16.mxu0 0
        %1416 = vmatmul.mubr.bf16.gmra.mrb[0].mxu0 %v1288
        %v1417 = vpop.f32.mrb[0].mxu0
        %v1418 = vadd.f32 0.0, %v1417
        %v1419 = vpop.f32.mrb[0].mxu0
        %v1420 = vpop.f32.mrb[0].mxu0
        %v1421 = vadd.f32 0.0, %v1420
        %v1422 = vpop.f32.mrb[0].mxu0
        %1423 = vmatprep.mubr.bf16.mxu0 0
        %1424 = vmatmul.mubr.bf16.gmra.mrb[0].mxu0 %v1289
        %v1425 = vpop.f32.mrb[0].mxu0
        %v1426 = vadd.f32 0.0, %v1425
        %v1427 = vpop.f32.mrb[0].mxu0
        %v1428 = vpop.f32.mrb[0].mxu0
        %v1429 = vadd.f32 0.0, %v1428
        %v1430 = vpop.f32.mrb[0].mxu0
        %1431 = vmatprep.mubr.bf16.mxu0 0
        %1432 = vmatmul.mubr.bf16.gmra.mrb[0].mxu0 %v1290
        %v1433 = vpop.f32.mrb[0].mxu0
        %v1434 = vadd.f32 0.0, %v1433
        %v1435 = vpop.f32.mrb[0].mxu0
        %v1436 = vpop.f32.mrb[0].mxu0
        %v1437 = vadd.f32 0.0, %v1436
        %v1438 = vpop.f32.mrb[0].mxu0
        %1439 = vmatprep.mubr.bf16.mxu0 0
        %1440 = vmatmul.mubr.bf16.gmra.mrb[0].mxu0 %v1291
        %v1441 = vpop.f32.mrb[0].mxu0
        %v1442 = vadd.f32 0.0, %v1441
        %v1443 = vpop.f32.mrb[0].mxu0
        %v1444 = vpop.f32.mrb[0].mxu0
        %v1445 = vadd.f32 0.0, %v1444
        %v1446 = vpop.f32.mrb[0].mxu0
        %1447 = vmatprep.mubr.bf16.mxu0 0
        %1448 = vmatmul.mubr.bf16.gmra.mrb[0].mxu0 %v1292
        %v1449 = vpop.f32.mrb[0].mxu0
        %v1450 = vadd.f32 0.0, %v1449
        %v1451 = vpop.f32.mrb[0].mxu0
        %v1452 = vpop.f32.mrb[0].mxu0
        %v1453 = vadd.f32 0.0, %v1452
        %v1454 = vpop.f32.mrb[0].mxu0
        %1455 = vmatprep.mubr.bf16.mxu0 0
        %1456 = vmatmul.mubr.bf16.gmra.mrb[0].mxu0 %v1293
        %v1457 = vpop.f32.mrb[0].mxu0
        %v1458 = vadd.f32 0.0, %v1457
        %v1459 = vpop.f32.mrb[0].mxu0
        %v1460 = vpop.f32.mrb[0].mxu0
        %v1461 = vadd.f32 0.0, %v1460
        %v1462 = vpop.f32.mrb[0].mxu0
        %1463 = vmatprep.mubr.bf16.mxu0 0
        %1464 = vmatmul.mubr.bf16.gmra.mrb[0].mxu0 %v1294
        %v1465 = vpop.f32.mrb[0].mxu0
        %v1466 = vadd.f32 0.0, %v1465
        %v1467 = vpop.f32.mrb[0].mxu0
        %v1468 = vpop.f32.mrb[0].mxu0
        %v1469 = vadd.f32 0.0, %v1468
        %v1470 = vpop.f32.mrb[0].mxu0
        %1471 = vdwg.mxu0
        %v1472 = vpack.c.bf16 %v1349, %v1346
        %v1473 = vpack.c.bf16 %v1357, %v1354
        %v1474 = vpack.c.bf16 %v1365, %v1362
        %v1475 = vpack.c.bf16 %v1373, %v1370
        %v1476 = vpack.c.bf16 %v1381, %v1378
        %v1477 = vpack.c.bf16 %v1389, %v1386
        %v1478 = vpack.c.bf16 %v1397, %v1394
        %v1479 = vpack.c.bf16 %v1405, %v1402
        %v1480 = vpack.c.bf16 %v1413, %v1410
        %v1481 = vpack.c.bf16 %v1421, %v1418
        %v1482 = vpack.c.bf16 %v1429, %v1426
        %v1483 = vpack.c.bf16 %v1437, %v1434
        %v1484 = vpack.c.bf16 %v1445, %v1442
        %v1485 = vpack.c.bf16 %v1453, %v1450
        %v1486 = vpack.c.bf16 %v1461, %v1458
        %v1487 = vpack.c.bf16 %v1469, %v1466
        %v1488 = vld [vmem:[%s8] sm:$0xf]
        %v1489 = vld [vmem:[%s8 + $0x4] sm:$0xf]
        %v1490 = vld [vmem:[%s8 + $0x8] sm:$0xf]
        %v1491 = vld [vmem:[%s8 + $0xc] sm:$0xf]
        %v1492 = vld [vmem:[%s8 + $0x10] sm:$0xf]
        %v1493 = vld [vmem:[%s8 + $0x14] sm:$0xf]
        %v1494 = vld [vmem:[%s8 + $0x18] sm:$0xf]
        %v1495 = vld [vmem:[%s8 + $0x1c] sm:$0xf]
        %v1496 = vld [vmem:[%s8 + $0x20] sm:$0xf]
        %v1497 = vld [vmem:[%s8 + $0x24] sm:$0xf]
        %v1498 = vld [vmem:[%s8 + $0x28] sm:$0xf]
        %v1499 = vld [vmem:[%s8 + $0x2c] sm:$0xf]
        %v1500 = vld [vmem:[%s8 + $0x30] sm:$0xf]
        %v1501 = vld [vmem:[%s8 + $0x34] sm:$0xf]
        %v1502 = vld [vmem:[%s8 + $0x38] sm:$0xf]
        %v1503 = vld [vmem:[%s8 + $0x3c] sm:$0xf]
        %v1504 = vld [vmem:[%s8 + $0x40] sm:$0xf]
        %v1505 = vld [vmem:[%s8 + $0x44] sm:$0xf]
        %v1506 = vld [vmem:[%s8 + $0x48] sm:$0xf]
        %v1507 = vld [vmem:[%s8 + $0x4c] sm:$0xf]
        %v1508 = vld [vmem:[%s8 + $0x50] sm:$0xf]
        %v1509 = vld [vmem:[%s8 + $0x54] sm:$0xf]
        %v1510 = vld [vmem:[%s8 + $0x58] sm:$0xf]
        %v1511 = vld [vmem:[%s8 + $0x5c] sm:$0xf]
        %v1512 = vld [vmem:[%s8 + $0x60] sm:$0xf]
        %v1513 = vld [vmem:[%s8 + $0x64] sm:$0xf]
        %v1514 = vld [vmem:[%s8 + $0x68] sm:$0xf]
        %v1515 = vld [vmem:[%s8 + $0x6c] sm:$0xf]
        %v1516 = vld [vmem:[%s8 + $0x70] sm:$0xf]
        %v1517 = vld [vmem:[%s8 + $0x74] sm:$0xf]
        %v1518 = vld [vmem:[%s8 + $0x78] sm:$0xf]
        %v1519 = vld [vmem:[%s8 + $0x7c] sm:$0xf]
        %1521 = vset.pattern.permute.xlu0 0
        %1522 = vperm.xlu0 %1521, %v1488
        %v1523 = vpop.permute.xlu0 %1522
        %v1526 = vunpack.c.l.s4 839922192
        %v1527 = vunpack.c.0.s8 %v1526
        %v1528 = vlaneseq
        %v1529 = vshrl.u32 %v1528, 7
        %v1530 = vsub.s32 %v1527, %v1529
        %v1531 = vrot.slane %v1523, %v1530
        %1533 = vset.pattern.permute.xlu0 0
        %1534 = vperm.xlu0 %1533, %v1489
        %v1535 = vpop.permute.xlu0 %1534
        %v1538 = vunpack.c.l.s4 839922192
        %v1539 = vunpack.c.0.s8 %v1538
        %v1540 = vlaneseq
        %v1541 = vshrl.u32 %v1540, 7
        %v1542 = vsub.s32 %v1539, %v1541
        %v1543 = vrot.slane %v1535, %v1542
        %1545 = vset.pattern.permute.xlu0 0
        %1546 = vperm.xlu0 %1545, %v1490
        %v1547 = vpop.permute.xlu0 %1546
        %v1550 = vunpack.c.l.s4 839922192
        %v1551 = vunpack.c.0.s8 %v1550
        %v1552 = vlaneseq
        %v1553 = vshrl.u32 %v1552, 7
        %v1554 = vsub.s32 %v1551, %v1553
        %v1555 = vrot.slane %v1547, %v1554
        %1557 = vset.pattern.permute.xlu0 0
        %1558 = vperm.xlu0 %1557, %v1491
        %v1559 = vpop.permute.xlu0 %1558
        %v1562 = vunpack.c.l.s4 839922192
        %v1563 = vunpack.c.0.s8 %v1562
        %v1564 = vlaneseq
        %v1565 = vshrl.u32 %v1564, 7
        %v1566 = vsub.s32 %v1563, %v1565
        %v1567 = vrot.slane %v1559, %v1566
        %1569 = vset.pattern.permute.xlu0 0
        %1570 = vperm.xlu0 %1569, %v1492
        %v1571 = vpop.permute.xlu0 %1570
        %v1574 = vunpack.c.l.s4 839922192
        %v1575 = vunpack.c.0.s8 %v1574
        %v1576 = vlaneseq
        %v1577 = vshrl.u32 %v1576, 7
        %v1578 = vsub.s32 %v1575, %v1577
        %v1579 = vrot.slane %v1571, %v1578
        %1581 = vset.pattern.permute.xlu0 0
        %1582 = vperm.xlu0 %1581, %v1493
        %v1583 = vpop.permute.xlu0 %1582
        %v1586 = vunpack.c.l.s4 839922192
        %v1587 = vunpack.c.0.s8 %v1586
        %v1588 = vlaneseq
        %v1589 = vshrl.u32 %v1588, 7
        %v1590 = vsub.s32 %v1587, %v1589
        %v1591 = vrot.slane %v1583, %v1590
        %1593 = vset.pattern.permute.xlu0 0
        %1594 = vperm.xlu0 %1593, %v1494
        %v1595 = vpop.permute.xlu0 %1594
        %v1598 = vunpack.c.l.s4 839922192
        %v1599 = vunpack.c.0.s8 %v1598
        %v1600 = vlaneseq
        %v1601 = vshrl.u32 %v1600, 7
        %v1602 = vsub.s32 %v1599, %v1601
        %v1603 = vrot.slane %v1595, %v1602
        %1605 = vset.pattern.permute.xlu0 0
        %1606 = vperm.xlu0 %1605, %v1495
        %v1607 = vpop.permute.xlu0 %1606
        %v1610 = vunpack.c.l.s4 839922192
        %v1611 = vunpack.c.0.s8 %v1610
        %v1612 = vlaneseq
        %v1613 = vshrl.u32 %v1612, 7
        %v1614 = vsub.s32 %v1611, %v1613
        %v1615 = vrot.slane %v1607, %v1614
        %1617 = vset.pattern.permute.xlu0 0
        %1618 = vperm.xlu0 %1617, %v1496
        %v1619 = vpop.permute.xlu0 %1618
        %v1622 = vunpack.c.l.s4 839922192
        %v1623 = vunpack.c.0.s8 %v1622
        %v1624 = vlaneseq
        %v1625 = vshrl.u32 %v1624, 7
        %v1626 = vsub.s32 %v1623, %v1625
        %v1627 = vrot.slane %v1619, %v1626
        %1629 = vset.pattern.permute.xlu0 0
        %1630 = vperm.xlu0 %1629, %v1497
        %v1631 = vpop.permute.xlu0 %1630
        %v1634 = vunpack.c.l.s4 839922192
        %v1635 = vunpack.c.0.s8 %v1634
        %v1636 = vlaneseq
        %v1637 = vshrl.u32 %v1636, 7
        %v1638 = vsub.s32 %v1635, %v1637
        %v1639 = vrot.slane %v1631, %v1638
        %1641 = vset.pattern.permute.xlu0 0
        %1642 = vperm.xlu0 %1641, %v1498
        %v1643 = vpop.permute.xlu0 %1642
        %v1646 = vunpack.c.l.s4 839922192
        %v1647 = vunpack.c.0.s8 %v1646
        %v1648 = vlaneseq
        %v1649 = vshrl.u32 %v1648, 7
        %v1650 = vsub.s32 %v1647, %v1649
        %v1651 = vrot.slane %v1643, %v1650
        %1653 = vset.pattern.permute.xlu0 0
        %1654 = vperm.xlu0 %1653, %v1499
        %v1655 = vpop.permute.xlu0 %1654
        %v1658 = vunpack.c.l.s4 839922192
        %v1659 = vunpack.c.0.s8 %v1658
        %v1660 = vlaneseq
        %v1661 = vshrl.u32 %v1660, 7
        %v1662 = vsub.s32 %v1659, %v1661
        %v1663 = vrot.slane %v1655, %v1662
        %1665 = vset.pattern.permute.xlu0 0
        %1666 = vperm.xlu0 %1665, %v1500
        %v1667 = vpop.permute.xlu0 %1666
        %v1670 = vunpack.c.l.s4 839922192
        %v1671 = vunpack.c.0.s8 %v1670
        %v1672 = vlaneseq
        %v1673 = vshrl.u32 %v1672, 7
        %v1674 = vsub.s32 %v1671, %v1673
        %v1675 = vrot.slane %v1667, %v1674
        %1677 = vset.pattern.permute.xlu0 0
        %1678 = vperm.xlu0 %1677, %v1501
        %v1679 = vpop.permute.xlu0 %1678
        %v1682 = vunpack.c.l.s4 839922192
        %v1683 = vunpack.c.0.s8 %v1682
        %v1684 = vlaneseq
        %v1685 = vshrl.u32 %v1684, 7
        %v1686 = vsub.s32 %v1683, %v1685
        %v1687 = vrot.slane %v1679, %v1686
        %1689 = vset.pattern.permute.xlu0 0
        %1690 = vperm.xlu0 %1689, %v1502
        %v1691 = vpop.permute.xlu0 %1690
        %v1694 = vunpack.c.l.s4 839922192
        %v1695 = vunpack.c.0.s8 %v1694
        %v1696 = vlaneseq
        %v1697 = vshrl.u32 %v1696, 7
        %v1698 = vsub.s32 %v1695, %v1697
        %v1699 = vrot.slane %v1691, %v1698
        %1701 = vset.pattern.permute.xlu0 0
        %1702 = vperm.xlu0 %1701, %v1503
        %v1703 = vpop.permute.xlu0 %1702
        %v1706 = vunpack.c.l.s4 839922192
        %v1707 = vunpack.c.0.s8 %v1706
        %v1708 = vlaneseq
        %v1709 = vshrl.u32 %v1708, 7
        %v1710 = vsub.s32 %v1707, %v1709
        %v1711 = vrot.slane %v1703, %v1710
        %1713 = vset.pattern.permute.xlu0 0
        %1714 = vperm.xlu0 %1713, %v1504
        %v1715 = vpop.permute.xlu0 %1714
        %v1718 = vunpack.c.l.s4 839922192
        %v1719 = vunpack.c.0.s8 %v1718
        %v1720 = vlaneseq
        %v1721 = vshrl.u32 %v1720, 7
        %v1722 = vsub.s32 %v1719, %v1721
        %v1723 = vrot.slane %v1715, %v1722
        %1725 = vset.pattern.permute.xlu0 0
        %1726 = vperm.xlu0 %1725, %v1505
        %v1727 = vpop.permute.xlu0 %1726
        %v1730 = vunpack.c.l.s4 839922192
        %v1731 = vunpack.c.0.s8 %v1730
        %v1732 = vlaneseq
        %v1733 = vshrl.u32 %v1732, 7
        %v1734 = vsub.s32 %v1731, %v1733
        %v1735 = vrot.slane %v1727, %v1734
        %1737 = vset.pattern.permute.xlu0 0
        %1738 = vperm.xlu0 %1737, %v1506
        %v1739 = vpop.permute.xlu0 %1738
        %v1742 = vunpack.c.l.s4 839922192
        %v1743 = vunpack.c.0.s8 %v1742
        %v1744 = vlaneseq
        %v1745 = vshrl.u32 %v1744, 7
        %v1746 = vsub.s32 %v1743, %v1745
        %v1747 = vrot.slane %v1739, %v1746
        %1749 = vset.pattern.permute.xlu0 0
        %1750 = vperm.xlu0 %1749, %v1507
        %v1751 = vpop.permute.xlu0 %1750
        %v1754 = vunpack.c.l.s4 839922192
        %v1755 = vunpack.c.0.s8 %v1754
        %v1756 = vlaneseq
        %v1757 = vshrl.u32 %v1756, 7
        %v1758 = vsub.s32 %v1755, %v1757
        %v1759 = vrot.slane %v1751, %v1758
        %1761 = vset.pattern.permute.xlu0 0
        %1762 = vperm.xlu0 %1761, %v1508
        %v1763 = vpop.permute.xlu0 %1762
        %v1766 = vunpack.c.l.s4 839922192
        %v1767 = vunpack.c.0.s8 %v1766
        %v1768 = vlaneseq
        %v1769 = vshrl.u32 %v1768, 7
        %v1770 = vsub.s32 %v1767, %v1769
        %v1771 = vrot.slane %v1763, %v1770
        %1773 = vset.pattern.permute.xlu0 0
        %1774 = vperm.xlu0 %1773, %v1509
        %v1775 = vpop.permute.xlu0 %1774
        %v1778 = vunpack.c.l.s4 839922192
        %v1779 = vunpack.c.0.s8 %v1778
        %v1780 = vlaneseq
        %v1781 = vshrl.u32 %v1780, 7
        %v1782 = vsub.s32 %v1779, %v1781
        %v1783 = vrot.slane %v1775, %v1782
        %1785 = vset.pattern.permute.xlu0 0
        %1786 = vperm.xlu0 %1785, %v1510
        %v1787 = vpop.permute.xlu0 %1786
        %v1790 = vunpack.c.l.s4 839922192
        %v1791 = vunpack.c.0.s8 %v1790
        %v1792 = vlaneseq
        %v1793 = vshrl.u32 %v1792, 7
        %v1794 = vsub.s32 %v1791, %v1793
        %v1795 = vrot.slane %v1787, %v1794
        %1797 = vset.pattern.permute.xlu0 0
        %1798 = vperm.xlu0 %1797, %v1511
        %v1799 = vpop.permute.xlu0 %1798
        %v1802 = vunpack.c.l.s4 839922192
        %v1803 = vunpack.c.0.s8 %v1802
        %v1804 = vlaneseq
        %v1805 = vshrl.u32 %v1804, 7
        %v1806 = vsub.s32 %v1803, %v1805
        %v1807 = vrot.slane %v1799, %v1806
        %1809 = vset.pattern.permute.xlu0 0
        %1810 = vperm.xlu0 %1809, %v1512
        %v1811 = vpop.permute.xlu0 %1810
        %v1814 = vunpack.c.l.s4 839922192
        %v1815 = vunpack.c.0.s8 %v1814
        %v1816 = vlaneseq
        %v1817 = vshrl.u32 %v1816, 7
        %v1818 = vsub.s32 %v1815, %v1817
        %v1819 = vrot.slane %v1811, %v1818
        %1821 = vset.pattern.permute.xlu0 0
        %1822 = vperm.xlu0 %1821, %v1513
        %v1823 = vpop.permute.xlu0 %1822
        %v1826 = vunpack.c.l.s4 839922192
        %v1827 = vunpack.c.0.s8 %v1826
        %v1828 = vlaneseq
        %v1829 = vshrl.u32 %v1828, 7
        %v1830 = vsub.s32 %v1827, %v1829
        %v1831 = vrot.slane %v1823, %v1830
        %1833 = vset.pattern.permute.xlu0 0
        %1834 = vperm.xlu0 %1833, %v1514
        %v1835 = vpop.permute.xlu0 %1834
        %v1838 = vunpack.c.l.s4 839922192
        %v1839 = vunpack.c.0.s8 %v1838
        %v1840 = vlaneseq
        %v1841 = vshrl.u32 %v1840, 7
        %v1842 = vsub.s32 %v1839, %v1841
        %v1843 = vrot.slane %v1835, %v1842
        %1845 = vset.pattern.permute.xlu0 0
        %1846 = vperm.xlu0 %1845, %v1515
        %v1847 = vpop.permute.xlu0 %1846
        %v1850 = vunpack.c.l.s4 839922192
        %v1851 = vunpack.c.0.s8 %v1850
        %v1852 = vlaneseq
        %v1853 = vshrl.u32 %v1852, 7
        %v1854 = vsub.s32 %v1851, %v1853
        %v1855 = vrot.slane %v1847, %v1854
        %1857 = vset.pattern.permute.xlu0 0
        %1858 = vperm.xlu0 %1857, %v1516
        %v1859 = vpop.permute.xlu0 %1858
        %v1862 = vunpack.c.l.s4 839922192
        %v1863 = vunpack.c.0.s8 %v1862
        %v1864 = vlaneseq
        %v1865 = vshrl.u32 %v1864, 7
        %v1866 = vsub.s32 %v1863, %v1865
        %v1867 = vrot.slane %v1859, %v1866
        %1869 = vset.pattern.permute.xlu0 0
        %1870 = vperm.xlu0 %1869, %v1517
        %v1871 = vpop.permute.xlu0 %1870
        %v1874 = vunpack.c.l.s4 839922192
        %v1875 = vunpack.c.0.s8 %v1874
        %v1876 = vlaneseq
        %v1877 = vshrl.u32 %v1876, 7
        %v1878 = vsub.s32 %v1875, %v1877
        %v1879 = vrot.slane %v1871, %v1878
        %1881 = vset.pattern.permute.xlu0 0
        %1882 = vperm.xlu0 %1881, %v1518
        %v1883 = vpop.permute.xlu0 %1882
        %v1886 = vunpack.c.l.s4 839922192
        %v1887 = vunpack.c.0.s8 %v1886
        %v1888 = vlaneseq
        %v1889 = vshrl.u32 %v1888, 7
        %v1890 = vsub.s32 %v1887, %v1889
        %v1891 = vrot.slane %v1883, %v1890
        %1893 = vset.pattern.permute.xlu0 0
        %1894 = vperm.xlu0 %1893, %v1519
        %v1895 = vpop.permute.xlu0 %1894
        %v1898 = vunpack.c.l.s4 839922192
        %v1899 = vunpack.c.0.s8 %v1898
        %v1900 = vlaneseq
        %v1901 = vshrl.u32 %v1900, 7
        %v1902 = vsub.s32 %v1899, %v1901
        %v1903 = vrot.slane %v1895, %v1902
        %v1936 = vunpack.c.l.b16 %v1531
        %v1937 = vunpack.c.l.b16 %v1543
        %v1938 = vunpack.c.l.b16 %v1555
        %v1939 = vunpack.c.l.b16 %v1567
        %v1940 = vunpack.c.l.b16 %v1579
        %v1941 = vunpack.c.l.b16 %v1591
        %v1942 = vunpack.c.l.b16 %v1603
        %v1943 = vunpack.c.l.b16 %v1615
        %v1944 = vunpack.c.l.b16 %v1627
        %v1945 = vunpack.c.l.b16 %v1639
        %v1946 = vunpack.c.l.b16 %v1651
        %v1947 = vunpack.c.l.b16 %v1663
        %v1948 = vunpack.c.l.b16 %v1675
        %v1949 = vunpack.c.l.b16 %v1687
        %v1950 = vunpack.c.l.b16 %v1699
        %v1951 = vunpack.c.l.b16 %v1711
        %v1952 = vunpack.c.l.b16 %v1723
        %v1953 = vunpack.c.l.b16 %v1735
        %v1954 = vunpack.c.l.b16 %v1747
        %v1955 = vunpack.c.l.b16 %v1759
        %v1956 = vunpack.c.l.b16 %v1771
        %v1957 = vunpack.c.l.b16 %v1783
        %v1958 = vunpack.c.l.b16 %v1795
        %v1959 = vunpack.c.l.b16 %v1807
        %v1960 = vunpack.c.l.b16 %v1819
        %v1961 = vunpack.c.l.b16 %v1831
        %v1962 = vunpack.c.l.b16 %v1843
        %v1963 = vunpack.c.l.b16 %v1855
        %v1964 = vunpack.c.l.b16 %v1867
        %v1965 = vunpack.c.l.b16 %v1879
        %v1966 = vunpack.c.l.b16 %v1891
        %v1967 = vunpack.c.l.b16 %v1903
        %v1968 = vpack.c.b16 %v1937, %v1936
        %v1969 = vpack.c.b16 %v1939, %v1938
        %v1970 = vpack.c.b16 %v1941, %v1940
        %v1971 = vpack.c.b16 %v1943, %v1942
        %v1972 = vpack.c.b16 %v1945, %v1944
        %v1973 = vpack.c.b16 %v1947, %v1946
        %v1974 = vpack.c.b16 %v1949, %v1948
        %v1975 = vpack.c.b16 %v1951, %v1950
        %v1976 = vpack.c.b16 %v1953, %v1952
        %v1977 = vpack.c.b16 %v1955, %v1954
        %v1978 = vpack.c.b16 %v1957, %v1956
        %v1979 = vpack.c.b16 %v1959, %v1958
        %v1980 = vpack.c.b16 %v1961, %v1960
        %v1981 = vpack.c.b16 %v1963, %v1962
        %v1982 = vpack.c.b16 %v1965, %v1964
        %v1983 = vpack.c.b16 %v1967, %v1966
        %v2000 = vadd.bf16 %v1472, %v1968
        %v2001 = vadd.bf16 %v1473, %v1969
        %v2002 = vadd.bf16 %v1474, %v1970
        %v2003 = vadd.bf16 %v1475, %v1971
        %v2004 = vadd.bf16 %v1476, %v1972
        %v2005 = vadd.bf16 %v1477, %v1973
        %v2006 = vadd.bf16 %v1478, %v1974
        %v2007 = vadd.bf16 %v1479, %v1975
        %v2008 = vadd.bf16 %v1480, %v1976
        %v2009 = vadd.bf16 %v1481, %v1977
        %v2010 = vadd.bf16 %v1482, %v1978
        %v2011 = vadd.bf16 %v1483, %v1979
        %v2012 = vadd.bf16 %v1484, %v1980
        %v2013 = vadd.bf16 %v1485, %v1981
        %v2014 = vadd.bf16 %v1486, %v1982
        %v2015 = vadd.bf16 %v1487, %v1983
        %v2016 = vmax.bf16 %v2000, 0
        %v2017 = vmax.bf16 %v2001, 0
        %v2018 = vmax.bf16 %v2002, 0
        %v2019 = vmax.bf16 %v2003, 0
        %v2020 = vmax.bf16 %v2004, 0
        %v2021 = vmax.bf16 %v2005, 0
        %v2022 = vmax.bf16 %v2006, 0
        %v2023 = vmax.bf16 %v2007, 0
        %v2024 = vmax.bf16 %v2008, 0
        %v2025 = vmax.bf16 %v2009, 0
        %v2026 = vmax.bf16 %v2010, 0
        %v2027 = vmax.bf16 %v2011, 0
        %v2028 = vmax.bf16 %v2012, 0
        %v2029 = vmax.bf16 %v2013, 0
        %v2030 = vmax.bf16 %v2014, 0
        %v2031 = vmax.bf16 %v2015, 0
        %v2032 = vld [vmem:[%s9] sm:$0x3]
        %v2033 = vld [vmem:[#allocation2] sm:$0x1]
        %2035 = vset.pattern.permute.xlu0 0
        %2036 = vperm.xlu0 %2035, %v2033
        %v2037 = vpop.permute.xlu0 %2036
        %v2039 = vlaneseq
        %v2040 = vshrl.u32 %v2039, 7
        %v2041 = vsub.s32 0, %v2040
        %v2042 = vrot.slane %v2037, %v2041
        %v2045 = vunpack.c.l.s4 1966171168
        %v2046 = vunpack.c.0.s8 %v2045
        %v2047 = vlaneseq
        %v2048 = vshrl.u32 %v2047, 7
        %v2049 = vsub.s32 %v2046, %v2048
        %v2050 = vrot.slane %v2032, %v2049
        %v2051 = vcombine.high %v2050, %v2050
        %v2053 = vunpack.c.l.s4 1966171168
        %v2054 = vunpack.c.0.s8 %v2053
        %v2055 = vlaneseq
        %v2056 = vshrl.u32 %v2055, 7
        %v2057 = vsub.s32 %v2054, %v2056
        %v2058 = vrot.slane %v2050, %v2057
        %v2060 = vunpack.c.l.s4 1966171168
        %v2061 = vunpack.c.0.s8 %v2060
        %v2062 = vlaneseq
        %v2063 = vshrl.u32 %v2062, 7
        %v2064 = vsub.s32 %v2061, %v2063
        %v2065 = vrot.slane %v2051, %v2064
        %2068 = vmatprep.subr.bf16.mxu0 0
        %2069 = vmatpush1.bf16.msra.mxu0 %v2016
        %2070 = vmatprep.subr.bf16.mxu0 0
        %2071 = vmatpush1.bf16.msra.mxu0 %v2017
        %2072 = vmatprep.subr.bf16.mxu0 0
        %2073 = vmatpush1.bf16.msra.mxu0 %v2018
        %2074 = vmatprep.subr.bf16.mxu0 0
        %2075 = vmatpush1.bf16.msra.mxu0 %v2019
        %2076 = vmatprep.subr.bf16.mxu0 0
        %2077 = vmatpush1.bf16.msra.mxu0 %v2020
        %2078 = vmatprep.subr.bf16.mxu0 0
        %2079 = vmatpush1.bf16.msra.mxu0 %v2021
        %2080 = vmatprep.subr.bf16.mxu0 0
        %2081 = vmatpush1.bf16.msra.mxu0 %v2022
        %2082 = vmatprep.subr.bf16.mxu0 0
        %2083 = vmatpush1.bf16.msra.mxu0 %v2023
        %2084 = vmatprep.subr.bf16.mxu0 0
        %2085 = vmatpush1.bf16.msra.mxu0 %v2024
        %2086 = vmatprep.subr.bf16.mxu0 0
        %2087 = vmatpush1.bf16.msra.mxu0 %v2025
        %2088 = vmatprep.subr.bf16.mxu0 0
        %2089 = vmatpush1.bf16.msra.mxu0 %v2026
        %2090 = vmatprep.subr.bf16.mxu0 0
        %2091 = vmatpush1.bf16.msra.mxu0 %v2027
        %2092 = vmatprep.subr.bf16.mxu0 0
        %2093 = vmatpush1.bf16.msra.mxu0 %v2028
        %2094 = vmatprep.subr.bf16.mxu0 0
        %2095 = vmatpush1.bf16.msra.mxu0 %v2029
        %2096 = vmatprep.subr.bf16.mxu0 0
        %2097 = vmatpush1.bf16.msra.mxu0 %v2030
        %2098 = vmatprep.subr.bf16.mxu0 0
        %2099 = vmatpush1.bf16.msra.mxu0 %v2031
        %2100 = vmatprep.mubr.bf16.mxu0 %v2065
        %2101 = vmatmul.mubr.bf16.gmra.mrb[0].mxu0 %v2058
        %v2102 = vpop.f32.mrb[0].mxu0
        %v2103 = vadd.f32 %v2042, %v2102
        %v2104 = vpop.f32.mrb[0].mxu0
        %v2105 = vpop.f32.mrb[0].mxu0
        %v2106 = vpop.f32.mrb[0].mxu0
        %2107 = vdwg.mxu0
        %2108 = vst [vmem:[%s378] sm:$0x1] %v2103
        %s2109 = sand.u32 %s271, 1
        %s2110 = scalar_lea.sflag [#allocation4], %s2109
        %s2111 = sand.u32 %s271, 1
        %s2112 = scalar_lea.vmem [#allocation3], %s2111
        // Predicated region
        $region65: #{tpu_custom_call.1} parent=63 // pred_check
          %p2113 = pneg %p281
        $region66: #{tpu_custom_call.1} parent=63 // pred_check_branch
          %2115 = sbr.rel (%p2113) target = $region68
        $region67: #{tpu_custom_call.1} parent=63 // pred_region
          %s2117 = ssub.s32 16, 16
          %2118 = vsyncadd %s2110, %s2117
          %s2119 = smul.addr %s27, 16
          %s2120 = scalar_lea.hbm %s11, %s2119
          %s2122 = sshll.u32 %s2112, 4
          %s2123 = int_to_ptr.vmem [resolvable:$true] %s2122
          %2125 = dma.vmem_to_hbm [thread:$0]  %s2123, 16, %s2120, %s2110
        $region68: #{tpu_custom_call.1} parent=63 // pred_fallthru
          _
      $region64: #{tpu_custom_call.1} parent=5 // pred_fallthru
        _
      %p2126 = scmp.le.s32.totalorder 2, %s22
      // Predicated region
      $region69: #{tpu_custom_call.1} parent=5 // pred_check
        %p2127 = pneg %p2126
      $region70: #{tpu_custom_call.1} parent=5 // pred_check_branch
        %2129 = sbr.rel (%p2127) target = $region72
      $region71: #{tpu_custom_call.1} parent=5 // pred_region
        %s2130 = ssub.s32 %s22, 2
        // Predicated region
        $region73: #{tpu_custom_call.1} parent=71 // pred_check
          %p2131 = pneg %p287
        $region74: #{tpu_custom_call.1} parent=71 // pred_check_branch
          %2133 = sbr.rel (%p2131) target = $region76
        $region75: #{tpu_custom_call.1} parent=71 // pred_region
          %s2134 = sand.u32 %s272, 1
          %s2135 = scalar_lea.sflag [#allocation4], %s2134
          %s2136 = sand.u32 %s272, 1
          %s2137 = scalar_lea.vmem [#allocation3], %s2136
          %2138 = dma.done %s2135, 16
        $region76: #{tpu_custom_call.1} parent=71 // pred_fallthru
          _
      $region72: #{tpu_custom_call.1} parent=5 // pred_fallthru
        _
    $region6: #{tpu_custom_call.1} parent=1 // loop_footer
      %s26 = sadd.s32 1, %s22
    $region7: #{tpu_custom_call.1} parent=1 // loop_footer_branch
      %21 = sbr.rel target = $region3
    $region8: #{tpu_custom_call.1} parent=1 // loop_exit
      _
    %2139 = vsyncpa [#allocation4], 1
    %s2140 = scalar_lea.sflag [#allocation4], 1
    %2141 = vsyncpa %s2140, 1

</llo_original>
